<compile_context>
chip_gen: v5e
topology: v5e:2x2
jax: 0.10.0
libtpu: 0.0.40
codegen_flags: <defaults>
</compile_context>

<pallas_src>
import functools
import math

import jax
import jax.numpy as jnp
from jax.experimental import pallas as pl
from jax.experimental.pallas import tpu as pltpu

_EPS = 0.8            # nn.BatchNorm1d(out_feat, 0.8): second positional arg is eps
_LEAKY_SLOPE = 0.2
_FUSED_VMEM_BYTES = 12 * 1024 * 1024   # fuse whole net if operands fit well under
                                       # v5e's 16 MiB default scoped VMEM
_TN_MAX = 2048                         # out_dim tile width for the split path


def _leaky_relu(x, slope=_LEAKY_SLOPE):
    return jnp.where(x > 0, x, slope * x)


def _dot_bf16(x, w_bf16):
    # bf16 x bf16 -> f32 accumulation on the MXU (native single-pass format).
    return jnp.dot(x.astype(jnp.bfloat16), w_bf16,
                   preferred_element_type=jnp.float32)


def _bn_leaky(x, gamma, beta, eps):
    # Train-mode BatchNorm1d with biased batch stats (two-pass, matches ref).
    mean = jnp.mean(x, axis=0, keepdims=True)
    xc = x - mean
    var = jnp.mean(xc * xc, axis=0, keepdims=True)
    return _leaky_relu(xc * (gamma * jax.lax.rsqrt(var + eps)) + beta)


# --------------------------------------------------------------------------
# Kernels
# --------------------------------------------------------------------------
def fused_kernel(z_ref,
                 w1_ref, b1_ref,
                 w2_ref, b2_ref, g2_ref, be2_ref,
                 w3_ref, b3_ref, g3_ref, be3_ref,
                 w4_ref, b4_ref,
                 out_ref):
    # Whole network in one VMEM shot (used when everything fits comfortably).
    h = _leaky_relu(_dot_bf16(z_ref[...], w1_ref[...]) + b1_ref[...])
    h = _bn_leaky(_dot_bf16(h, w2_ref[...]) + b2_ref[...],
                  g2_ref[...], be2_ref[...], _EPS)
    h = _bn_leaky(_dot_bf16(h, w3_ref[...]) + b3_ref[...],
                  g3_ref[...], be3_ref[...], _EPS)
    out_ref[...] = jnp.tanh(_dot_bf16(h, w4_ref[...]) + b4_ref[...])


def hidden_kernel(z_ref,
                  w1_ref, b1_ref,
                  w2_ref, b2_ref, g2_ref, be2_ref,
                  w3_ref, b3_ref, g3_ref, be3_ref,
                  h_ref):
    # Layers 1-3 (tiny weights), single untiled call. BN needs the full batch,
    # so this kernel is never tiled over B.
    h = _leaky_relu(_dot_bf16(z_ref[...], w1_ref[...]) + b1_ref[...])
    h = _bn_leaky(_dot_bf16(h, w2_ref[...]) + b2_ref[...],
                  g2_ref[...], be2_ref[...], _EPS)
    h = _bn_leaky(_dot_bf16(h, w3_ref[...]) + b3_ref[...],
                  g3_ref[...], be3_ref[...], _EPS)
    h_ref[...] = h.astype(jnp.bfloat16)   # bf16 round-trip halves h's HBM bytes


def output_kernel(h_ref, w4_ref, b4_ref, out_ref):
    # Linear(512, TN) + Tanh; one out_dim tile per grid step. h arrives bf16.
    out_ref[...] = jnp.tanh(
        jnp.dot(h_ref[...], w4_ref[...], preferred_element_type=jnp.float32)
        + b4_ref[...])


# --------------------------------------------------------------------------
# Wrapper
# --------------------------------------------------------------------------
def prepare_params(params, img_shape):
    """One-time prep (call once, NOT per forward): cast weights to bf16 and
    pad w4/b4 to a lane-dense (multiple-of-128) output width."""
    out_dim = int(math.prod(img_shape))
    out_dim_p = ((out_dim + 127) // 128) * 128
    prepared = {
        "w1": params["w1"].astype(jnp.bfloat16), "b1": params["b1"],
        "w2": params["w2"].astype(jnp.bfloat16), "b2": params["b2"],
        "g2": params["g2"], "be2": params["be2"],
        "w3": params["w3"].astype(jnp.bfloat16), "b3": params["b3"],
        "g3": params["g3"], "be3": params["be3"],
    }
    w4 = params["w4"].astype(jnp.bfloat16)
    b4 = params["b4"]
    if out_dim_p != out_dim:
        pad = out_dim_p - out_dim
        w4 = jnp.pad(w4, ((0, 0), (0, pad)))
        b4 = jnp.pad(b4, ((0, 0), (0, pad)))
    prepared["w4"] = w4
    prepared["b4"] = b4
    return prepared


def generator_forward(z, prepared, img_shape):
    """z: (B, latent_dim) f32, prepared: output of prepare_params
    -> img: (B, *img_shape) f32."""
    B, latent_dim = z.shape
    out_dim = int(math.prod(img_shape))
    out_dim_p = prepared["w4"].shape[1]

    vmem = pl.BlockSpec(memory_space=pltpu.MemorySpace.VMEM)

    hidden_args = (z,
                   prepared["w1"], prepared["b1"],
                   prepared["w2"], prepared["b2"], prepared["g2"], prepared["be2"],
                   prepared["w3"], prepared["b3"], prepared["g3"], prepared["be3"])
    hidden_bytes = sum(int(a.size) * a.dtype.itemsize for a in hidden_args)
    hidden_flops = 2 * B * (latent_dim * 128 + 128 * 256 + 256 * 512)

    fused_bytes = (hidden_bytes
                   + int(prepared["w4"].size) * 2
                   + int(prepared["b4"].size) * 4
                   + B * out_dim_p * 4)

    if fused_bytes <= _FUSED_VMEM_BYTES:
        # ---- Fused path: one pallas_call for the whole network --------------
        out_flat = pl.pallas_call(
            fused_kernel,
            out_shape=jax.ShapeDtypeStruct((B, out_dim_p), jnp.float32),
            in_specs=[vmem] * (len(hidden_args) + 2),
            out_specs=vmem,
            cost_estimate=pl.CostEstimate(
                flops=hidden_flops + 2 * B * 512 * out_dim_p,
                transcendentals=2 * (256 + 512) + B * out_dim_p,
                bytes_accessed=fused_bytes),
        )(*hidden_args, prepared["w4"], prepared["b4"])
    else:
        # ---- Split path: layers 1-3, then stream the 512 x out_dim layer ----
        h = pl.pallas_call(
            hidden_kernel,
            out_shape=jax.ShapeDtypeStruct((B, 512), jnp.bfloat16),
            in_specs=[vmem] * len(hidden_args),
            out_specs=vmem,
            cost_estimate=pl.CostEstimate(
                flops=hidden_flops,
                transcendentals=2 * (256 + 512),
                bytes_accessed=hidden_bytes + B * 512 * 2),
        )(*hidden_args)

        TN = min(_TN_MAX, out_dim_p)
        n_tiles = pl.cdiv(out_dim_p, TN)
        out_flat = pl.pallas_call(
            output_kernel,
            out_shape=jax.ShapeDtypeStruct((B, out_dim_p), jnp.float32),
            grid=(n_tiles,),
            in_specs=[
                pl.BlockSpec((B, 512), lambda j: (0, 0)),   # h: resident
                pl.BlockSpec((512, TN), lambda j: (0, j)),  # w4: streamed
                pl.BlockSpec((1, TN), lambda j: (0, j)),    # b4
            ],
            out_specs=pl.BlockSpec((B, TN), lambda j: (0, j)),
            compiler_params=pltpu.CompilerParams(
                dimension_semantics=("parallel",)),
            cost_estimate=pl.CostEstimate(
                flops=2 * B * 512 * out_dim_p,
                transcendentals=B * out_dim_p,
                bytes_accessed=(B * 512 * 2 + 512 * out_dim_p * 2
                                + out_dim_p * 4 + B * out_dim_p * 4)),
        )(h, prepared["w4"], prepared["b4"])

    if out_dim_p != out_dim:
        out_flat = out_flat[:, :out_dim]
    return out_flat.reshape(B, *img_shape)


# --------------------------------------------------------------------------
# Reference & init
# --------------------------------------------------------------------------
def generator_reference(z, params, img_shape):
    """Pure-JAX reference (same bf16-matmul / f32-accumulate math)."""
    def dot(x, w):
        return jnp.dot(x.astype(jnp.bfloat16), w.astype(jnp.bfloat16),
                       preferred_element_type=jnp.float32)

    def bn(x, gamma, beta):
        mean = jnp.mean(x, axis=0, keepdims=True)
        var = jnp.mean((x - mean) ** 2, axis=0, keepdims=True)
        return (x - mean) * jax.lax.rsqrt(var + _EPS) * gamma + beta

    h = _leaky_relu(dot(z, params["w1"]) + params["b1"])
    h = _leaky_relu(bn(dot(h, params["w2"]) + params["b2"],
                       params["g2"], params["be2"]))
    h = _leaky_relu(bn(dot(h, params["w3"]) + params["b3"],
                       params["g3"], params["be3"]))
    h = jnp.tanh(dot(h, params["w4"]) + params["b4"])
    return h.reshape(z.shape[0], *img_shape)


def init_params(key, latent_dim, img_shape):
    """PyTorch nn.Linear default init U[-1/sqrt(in), 1/sqrt(in)]; BN gamma=1, beta=0."""
    out_dim = int(math.prod(img_shape))
    dims = [(latent_dim, 128), (128, 256), (256, 512), (512, out_dim)]
    params = {}
    keys = jax.random.split(key, 2 * len(dims))
    for i, (fan_in, fan_out) in enumerate(dims):
        bound = 1.0 / math.sqrt(fan_in)
        params[f"w{i + 1}"] = jax.random.uniform(
            keys[2 * i], (fan_in, fan_out), minval=-bound, maxval=bound,
            dtype=jnp.float32)
        params[f"b{i + 1}"] = jax.random.uniform(
            keys[2 * i + 1], (1, fan_out), minval=-bound, maxval=bound,
            dtype=jnp.float32)
    params["g2"] = jnp.ones((1, 256), jnp.float32)
    params["be2"] = jnp.zeros((1, 256), jnp.float32)
    params["g3"] = jnp.ones((1, 512), jnp.float32)
    params["be3"] = jnp.zeros((1, 512), jnp.float32)
    return params


if __name__ == "__main__":
    key = jax.random.PRNGKey(0)
    k_params, k_z = jax.random.split(key)

    configs = [
        # (latent_dim, img_shape, batch)
        (32, (1, 16, 16), 64),   # small out_dim -> fused single-kernel path
        (32, (3, 64, 64), 64),   # large out_dim -> split / streamed w4 path
    ]
    for latent_dim, img_shape, batch in configs:
        params = init_params(k_params, latent_dim, img_shape)
        prepared = prepare_params(params, img_shape)   # one-time bf16 cast / pad
        z = jax.random.normal(k_z, (batch, latent_dim), dtype=jnp.float32)

        fwd = jax.jit(functools.partial(generator_forward, img_shape=img_shape))
        img = fwd(z, prepared)
        jax.block_until_ready(img)

        assert img.shape == (batch, *img_shape), img.shape
        assert img.dtype == jnp.float32

        ref = generator_reference(z, params, img_shape)
        max_err = float(jnp.max(jnp.abs(img - ref)))
        assert max_err < 5e-2, f"{img_shape}: max abs error vs reference {max_err}"

    print("KERNEL_OK")
</pallas_src>

<mosaic_0001>
module attributes {stable_mosaic.version = 11 : i64} {
  func.func @fused_kernel(%arg0: memref<64x32xf32, #tpu.memory_space<vmem>>, %arg1: memref<32x128xbf16, #tpu.memory_space<vmem>>, %arg2: memref<1x128xf32, #tpu.memory_space<vmem>>, %arg3: memref<128x256xbf16, #tpu.memory_space<vmem>>, %arg4: memref<1x256xf32, #tpu.memory_space<vmem>>, %arg5: memref<1x256xf32, #tpu.memory_space<vmem>>, %arg6: memref<1x256xf32, #tpu.memory_space<vmem>>, %arg7: memref<256x512xbf16, #tpu.memory_space<vmem>>, %arg8: memref<1x512xf32, #tpu.memory_space<vmem>>, %arg9: memref<1x512xf32, #tpu.memory_space<vmem>>, %arg10: memref<1x512xf32, #tpu.memory_space<vmem>>, %arg11: memref<512x256xbf16, #tpu.memory_space<vmem>>, %arg12: memref<1x256xf32, #tpu.memory_space<vmem>>, %arg13: memref<64x256xf32, #tpu.memory_space<vmem>>) attributes {dimension_semantics = [], scalar_prefetch = 0 : i64, scratch_operands = 0 : i64, tpu.core_type = #tpu.core_type<tc>} {
    %c0 = arith.constant 0 : index
    %c0_0 = arith.constant 0 : index
    %0 = vector.load %arg0[%c0, %c0_0] : memref<64x32xf32, #tpu.memory_space<vmem>>, vector<64x32xf32>
    %c0_1 = arith.constant 0 : index
    %c0_2 = arith.constant 0 : index
    %1 = vector.load %arg1[%c0_1, %c0_2] : memref<32x128xbf16, #tpu.memory_space<vmem>>, vector<32x128xbf16>
    %2 = arith.truncf %0 : vector<64x32xf32> to vector<64x32xbf16>
    %cst = arith.constant dense<0.000000e+00> : vector<64x128xf32>
    %3 = tpu.matmul %2, %1, %cst {dimension_numbers = #tpu.dot_dimension_numbers<[1], [0], [0], [1], [0, 0, 1, 1], [], []>} : vector<64x32xbf16>, vector<32x128xbf16>, vector<64x128xf32> -> vector<64x128xf32>
    %c0_3 = arith.constant 0 : index
    %c0_4 = arith.constant 0 : index
    %4 = vector.load %arg2[%c0_3, %c0_4] : memref<1x128xf32, #tpu.memory_space<vmem>>, vector<1x128xf32>
    %5 = vector.broadcast %4 : vector<1x128xf32> to vector<64x128xf32>
    %6 = arith.addf %3, %5 : vector<64x128xf32>
    %cst_5 = arith.constant 0.000000e+00 : f32
    %7 = vector.broadcast %cst_5 : f32 to vector<64x128xf32>
    %8 = arith.cmpf ogt, %6, %7 : vector<64x128xf32>
    %cst_6 = arith.constant 2.000000e-01 : f32
    %9 = vector.broadcast %cst_6 : f32 to vector<64x128xf32>
    %10 = arith.mulf %9, %6 : vector<64x128xf32>
    %11 = arith.select %8, %6, %10 : vector<64x128xi1>, vector<64x128xf32>
    %c0_7 = arith.constant 0 : index
    %c0_8 = arith.constant 0 : index
    %12 = vector.load %arg3[%c0_7, %c0_8] : memref<128x256xbf16, #tpu.memory_space<vmem>>, vector<128x256xbf16>
    %13 = arith.truncf %11 : vector<64x128xf32> to vector<64x128xbf16>
    %cst_9 = arith.constant dense<0.000000e+00> : vector<64x256xf32>
    %14 = tpu.matmul %13, %12, %cst_9 {dimension_numbers = #tpu.dot_dimension_numbers<[1], [0], [0], [1], [0, 0, 1, 1], [], []>} : vector<64x128xbf16>, vector<128x256xbf16>, vector<64x256xf32> -> vector<64x256xf32>
    %c0_10 = arith.constant 0 : index
    %c0_11 = arith.constant 0 : index
    %15 = vector.load %arg4[%c0_10, %c0_11] : memref<1x256xf32, #tpu.memory_space<vmem>>, vector<1x256xf32>
    %16 = vector.broadcast %15 : vector<1x256xf32> to vector<64x256xf32>
    %17 = arith.addf %14, %16 : vector<64x256xf32>
    %c0_12 = arith.constant 0 : index
    %c0_13 = arith.constant 0 : index
    %18 = vector.load %arg5[%c0_12, %c0_13] : memref<1x256xf32, #tpu.memory_space<vmem>>, vector<1x256xf32>
    %c0_14 = arith.constant 0 : index
    %c0_15 = arith.constant 0 : index
    %19 = vector.load %arg6[%c0_14, %c0_15] : memref<1x256xf32, #tpu.memory_space<vmem>>, vector<1x256xf32>
    %cst_16 = arith.constant dense<0.000000e+00> : vector<256xf32>
    %20 = vector.multi_reduction <add>, %17, %cst_16 [0] : vector<64x256xf32> to vector<256xf32>
    %21 = vector.shape_cast %20 : vector<256xf32> to vector<1x256xf32>
    %cst_17 = arith.constant 6.400000e+01 : f32
    %22 = vector.broadcast %cst_17 : f32 to vector<1x256xf32>
    %23 = arith.divf %21, %22 : vector<1x256xf32>
    %24 = vector.broadcast %23 : vector<1x256xf32> to vector<64x256xf32>
    %25 = arith.subf %17, %24 : vector<64x256xf32>
    %26 = arith.mulf %25, %25 : vector<64x256xf32>
    %cst_18 = arith.constant dense<0.000000e+00> : vector<256xf32>
    %27 = vector.multi_reduction <add>, %26, %cst_18 [0] : vector<64x256xf32> to vector<256xf32>
    %28 = vector.shape_cast %27 : vector<256xf32> to vector<1x256xf32>
    %cst_19 = arith.constant 6.400000e+01 : f32
    %29 = vector.broadcast %cst_19 : f32 to vector<1x256xf32>
    %30 = arith.divf %28, %29 : vector<1x256xf32>
    %cst_20 = arith.constant 8.000000e-01 : f32
    %31 = vector.broadcast %cst_20 : f32 to vector<1x256xf32>
    %32 = arith.addf %30, %31 : vector<1x256xf32>
    %33 = math.rsqrt %32 : vector<1x256xf32>
    %34 = arith.mulf %18, %33 : vector<1x256xf32>
    %35 = vector.broadcast %34 : vector<1x256xf32> to vector<64x256xf32>
    %36 = arith.mulf %25, %35 : vector<64x256xf32>
    %37 = vector.broadcast %19 : vector<1x256xf32> to vector<64x256xf32>
    %38 = arith.addf %36, %37 : vector<64x256xf32>
    %cst_21 = arith.constant 0.000000e+00 : f32
    %39 = vector.broadcast %cst_21 : f32 to vector<64x256xf32>
    %40 = arith.cmpf ogt, %38, %39 : vector<64x256xf32>
    %cst_22 = arith.constant 2.000000e-01 : f32
    %41 = vector.broadcast %cst_22 : f32 to vector<64x256xf32>
    %42 = arith.mulf %41, %38 : vector<64x256xf32>
    %43 = arith.select %40, %38, %42 : vector<64x256xi1>, vector<64x256xf32>
    %c0_23 = arith.constant 0 : index
    %c0_24 = arith.constant 0 : index
    %44 = vector.load %arg7[%c0_23, %c0_24] : memref<256x512xbf16, #tpu.memory_space<vmem>>, vector<256x512xbf16>
    %45 = arith.truncf %43 : vector<64x256xf32> to vector<64x256xbf16>
    %cst_25 = arith.constant dense<0.000000e+00> : vector<64x512xf32>
    %46 = tpu.matmul %45, %44, %cst_25 {dimension_numbers = #tpu.dot_dimension_numbers<[1], [0], [0], [1], [0, 0, 1, 1], [], []>} : vector<64x256xbf16>, vector<256x512xbf16>, vector<64x512xf32> -> vector<64x512xf32>
    %c0_26 = arith.constant 0 : index
    %c0_27 = arith.constant 0 : index
    %47 = vector.load %arg8[%c0_26, %c0_27] : memref<1x512xf32, #tpu.memory_space<vmem>>, vector<1x512xf32>
    %48 = vector.broadcast %47 : vector<1x512xf32> to vector<64x512xf32>
    %49 = arith.addf %46, %48 : vector<64x512xf32>
    %c0_28 = arith.constant 0 : index
    %c0_29 = arith.constant 0 : index
    %50 = vector.load %arg9[%c0_28, %c0_29] : memref<1x512xf32, #tpu.memory_space<vmem>>, vector<1x512xf32>
    %c0_30 = arith.constant 0 : index
    %c0_31 = arith.constant 0 : index
    %51 = vector.load %arg10[%c0_30, %c0_31] : memref<1x512xf32, #tpu.memory_space<vmem>>, vector<1x512xf32>
    %cst_32 = arith.constant dense<0.000000e+00> : vector<512xf32>
    %52 = vector.multi_reduction <add>, %49, %cst_32 [0] : vector<64x512xf32> to vector<512xf32>
    %53 = vector.shape_cast %52 : vector<512xf32> to vector<1x512xf32>
    %cst_33 = arith.constant 6.400000e+01 : f32
    %54 = vector.broadcast %cst_33 : f32 to vector<1x512xf32>
    %55 = arith.divf %53, %54 : vector<1x512xf32>
    %56 = vector.broadcast %55 : vector<1x512xf32> to vector<64x512xf32>
    %57 = arith.subf %49, %56 : vector<64x512xf32>
    %58 = arith.mulf %57, %57 : vector<64x512xf32>
    %cst_34 = arith.constant dense<0.000000e+00> : vector<512xf32>
    %59 = vector.multi_reduction <add>, %58, %cst_34 [0] : vector<64x512xf32> to vector<512xf32>
    %60 = vector.shape_cast %59 : vector<512xf32> to vector<1x512xf32>
    %cst_35 = arith.constant 6.400000e+01 : f32
    %61 = vector.broadcast %cst_35 : f32 to vector<1x512xf32>
    %62 = arith.divf %60, %61 : vector<1x512xf32>
    %cst_36 = arith.constant 8.000000e-01 : f32
    %63 = vector.broadcast %cst_36 : f32 to vector<1x512xf32>
    %64 = arith.addf %62, %63 : vector<1x512xf32>
    %65 = math.rsqrt %64 : vector<1x512xf32>
    %66 = arith.mulf %50, %65 : vector<1x512xf32>
    %67 = vector.broadcast %66 : vector<1x512xf32> to vector<64x512xf32>
    %68 = arith.mulf %57, %67 : vector<64x512xf32>
    %69 = vector.broadcast %51 : vector<1x512xf32> to vector<64x512xf32>
    %70 = arith.addf %68, %69 : vector<64x512xf32>
    %cst_37 = arith.constant 0.000000e+00 : f32
    %71 = vector.broadcast %cst_37 : f32 to vector<64x512xf32>
    %72 = arith.cmpf ogt, %70, %71 : vector<64x512xf32>
    %cst_38 = arith.constant 2.000000e-01 : f32
    %73 = vector.broadcast %cst_38 : f32 to vector<64x512xf32>
    %74 = arith.mulf %73, %70 : vector<64x512xf32>
    %75 = arith.select %72, %70, %74 : vector<64x512xi1>, vector<64x512xf32>
    %c0_39 = arith.constant 0 : index
    %c0_40 = arith.constant 0 : index
    %76 = vector.load %arg11[%c0_39, %c0_40] : memref<512x256xbf16, #tpu.memory_space<vmem>>, vector<512x256xbf16>
    %77 = arith.truncf %75 : vector<64x512xf32> to vector<64x512xbf16>
    %cst_41 = arith.constant dense<0.000000e+00> : vector<64x256xf32>
    %78 = tpu.matmul %77, %76, %cst_41 {dimension_numbers = #tpu.dot_dimension_numbers<[1], [0], [0], [1], [0, 0, 1, 1], [], []>} : vector<64x512xbf16>, vector<512x256xbf16>, vector<64x256xf32> -> vector<64x256xf32>
    %c0_42 = arith.constant 0 : index
    %c0_43 = arith.constant 0 : index
    %79 = vector.load %arg12[%c0_42, %c0_43] : memref<1x256xf32, #tpu.memory_space<vmem>>, vector<1x256xf32>
    %80 = vector.broadcast %79 : vector<1x256xf32> to vector<64x256xf32>
    %81 = arith.addf %78, %80 : vector<64x256xf32>
    %82 = math.tanh %81 : vector<64x256xf32>
    %c0_44 = arith.constant 0 : index
    %c0_45 = arith.constant 0 : index
    %83 = vector.load %arg13[%c0_44, %c0_45] : memref<64x256xf32, #tpu.memory_space<vmem>>, vector<64x256xf32>
    tpu.vector_store %arg13[%c0_44, %c0_45], %82 {strides = array<i32>} : memref<64x256xf32, #tpu.memory_space<vmem>>, vector<64x256xf32>,
    return
  }
}

</mosaic_0001>

<llo_original>
// kernel: generator_forward.1
$region0: #{generator_forward.1}
  #allocation0 [shape = 'u32[]', space=smem, size = 0x4, offset = 0x4, fixed_abs, tag = 'smem constant byte address 0x4 - core index']
  #allocation1 [shape = 'u32[72,128]{1,0:T(1,128)}', space=vmem, size = 0x9000, scoped, tag = 'internal scratch']
  %s0 = inlined_call_operand.vmem [shape: f32[64,32], index: 0, kind: input, shape index: {}]
  %s1 = inlined_call_operand.vmem [shape: bf16[32,128], index: 1, kind: input, shape index: {}]
  %s2 = inlined_call_operand.vmem [shape: f32[1,128], index: 2, kind: input, shape index: {}]
  %s3 = inlined_call_operand.hbm [shape: bf16[128,256], index: 3, kind: input, shape index: {}]
  %s4 = inlined_call_operand.vmem [shape: f32[1,256], index: 4, kind: input, shape index: {}]
  %s5 = inlined_call_operand.vmem [shape: f32[1,256], index: 5, kind: input, shape index: {}]
  %s6 = inlined_call_operand.vmem [shape: f32[1,256], index: 6, kind: input, shape index: {}]
  %s7 = inlined_call_operand.hbm [shape: bf16[256,512], index: 7, kind: input, shape index: {}]
  %s8 = inlined_call_operand.vmem [shape: f32[1,512], index: 8, kind: input, shape index: {}]
  %s9 = inlined_call_operand.vmem [shape: f32[1,512], index: 9, kind: input, shape index: {}]
  %s10 = inlined_call_operand.vmem [shape: f32[1,512], index: 10, kind: input, shape index: {}]
  %s11 = inlined_call_operand.hbm [shape: bf16[512,256], index: 11, kind: input, shape index: {}]
  %s12 = inlined_call_operand.vmem [shape: f32[1,256], index: 12, kind: input, shape index: {}]
  %s13 = inlined_call_operand.vmem [shape: f32[64,256], index: 13, kind: output, shape index: {}]
  %s14 = sld [smem:[#allocation0]]
  $region74: #{generator_forward.1} parent=0
    _
  %s16 = ssub.s32 1, %s14
  %s17 = scalar_select 0, %s16, %s14
  $region1: #{generator_forward.1} parent=0
    #allocation2 [shape = 'u8[65536]{0}', space=vmem, size = 0x10000, scoped, tag = 'input window, operand 3, single buffered']
    #allocation3 [shape = 's32[1]{0}', space=sflag, size = 0x4, scoped, tag = 'scoped memory for generator_forward.1']
    #allocation4 [shape = 'u8[262144]{0}', space=vmem, size = 0x40000, scoped, tag = 'input window, operand 7, single buffered']
    #allocation5 [shape = 's32[1]{0}', space=sflag, size = 0x4, scoped, tag = 'scoped memory for generator_forward.1']
    #allocation6 [shape = 'u8[262144]{0}', space=vmem, size = 0x40000, scoped, tag = 'input window, operand 11, single buffered']
    %18 = vsyncpa [#allocation3], 0
    %19 = vsyncpa [#allocation5], 0
    // Predicated region
    $region2: #{generator_forward.1} parent=1 // pred_check
      _
    $region3: #{generator_forward.1} parent=1 // pred_check_branch
      %21 = sbr.rel (0) target = $region5
    $region4: #{generator_forward.1} parent=1 // pred_region
      _
    $region5: #{generator_forward.1} parent=1 // pred_fallthru
      _
    // Predicated region
    $region6: #{generator_forward.1} parent=1 // pred_check
      _
    $region7: #{generator_forward.1} parent=1 // pred_check_branch
      %23 = sbr.rel (0) target = $region9
    $region8: #{generator_forward.1} parent=1 // pred_region
      _
    $region9: #{generator_forward.1} parent=1 // pred_fallthru
      _
    // Predicated region
    $region10: #{generator_forward.1} parent=1 // pred_check
      _
    $region11: #{generator_forward.1} parent=1 // pred_check_branch
      %25 = sbr.rel (0) target = $region13
    $region12: #{generator_forward.1} parent=1 // pred_region
      _
    $region13: #{generator_forward.1} parent=1 // pred_fallthru
      _
    // Predicated region
    $region14: #{generator_forward.1} parent=1 // pred_check
      _
    $region15: #{generator_forward.1} parent=1 // pred_check_branch
      %27 = sbr.rel (0) target = $region17
    $region16: #{generator_forward.1} parent=1 // pred_region
      %29 = vsyncadd [#allocation3], 0
      %s30 = sshll.u32 %s3, 4
      %s31 = int_to_ptr.hbm [resolvable:$true] %s30
      %s32 = sshll.u32 [#allocation2], 4
      %s33 = int_to_ptr.vmem [resolvable:$true] %s32
      %38 = dma.hbm_to_vmem [thread:$0]  %s31, 2048, %s33, [#allocation3], 128, 128, 8
    $region17: #{generator_forward.1} parent=1 // pred_fallthru
      _
    // Predicated region
    $region18: #{generator_forward.1} parent=1 // pred_check
      _
    $region19: #{generator_forward.1} parent=1 // pred_check_branch
      %40 = sbr.rel (0) target = $region21
    $region20: #{generator_forward.1} parent=1 // pred_region
      _
    $region21: #{generator_forward.1} parent=1 // pred_fallthru
      _
    // Predicated region
    $region22: #{generator_forward.1} parent=1 // pred_check
      _
    $region23: #{generator_forward.1} parent=1 // pred_check_branch
      %42 = sbr.rel (0) target = $region25
    $region24: #{generator_forward.1} parent=1 // pred_region
      _
    $region25: #{generator_forward.1} parent=1 // pred_fallthru
      _
    // Predicated region
    $region26: #{generator_forward.1} parent=1 // pred_check
      _
    $region27: #{generator_forward.1} parent=1 // pred_check_branch
      %44 = sbr.rel (0) target = $region29
    $region28: #{generator_forward.1} parent=1 // pred_region
      _
    $region29: #{generator_forward.1} parent=1 // pred_fallthru
      _
    // Predicated region
    $region30: #{generator_forward.1} parent=1 // pred_check
      _
    $region31: #{generator_forward.1} parent=1 // pred_check_branch
      %46 = sbr.rel (0) target = $region33
    $region32: #{generator_forward.1} parent=1 // pred_region
      %48 = vsyncadd [#allocation5], 0
      %s49 = sshll.u32 %s7, 4
      %s50 = int_to_ptr.hbm [resolvable:$true] %s49
      %s51 = sshll.u32 [#allocation4], 4
      %s52 = int_to_ptr.vmem [resolvable:$true] %s51
      %57 = dma.hbm_to_vmem [thread:$0]  %s50, 8192, %s52, [#allocation5], 256, 256, 16
    $region33: #{generator_forward.1} parent=1 // pred_fallthru
      _
    // Predicated region
    $region34: #{generator_forward.1} parent=1 // pred_check
      _
    $region35: #{generator_forward.1} parent=1 // pred_check_branch
      %59 = sbr.rel (0) target = $region37
    $region36: #{generator_forward.1} parent=1 // pred_region
      _
    $region37: #{generator_forward.1} parent=1 // pred_fallthru
      _
    // Predicated region
    $region38: #{generator_forward.1} parent=1 // pred_check
      _
    $region39: #{generator_forward.1} parent=1 // pred_check_branch
      %61 = sbr.rel (0) target = $region41
    $region40: #{generator_forward.1} parent=1 // pred_region
      _
    $region41: #{generator_forward.1} parent=1 // pred_fallthru
      _
    // Predicated region
    $region42: #{generator_forward.1} parent=1 // pred_check
      _
    $region43: #{generator_forward.1} parent=1 // pred_check_branch
      %63 = sbr.rel (0) target = $region45
    $region44: #{generator_forward.1} parent=1 // pred_region
      _
    $region45: #{generator_forward.1} parent=1 // pred_fallthru
      _
    // Predicated region
    $region46: #{generator_forward.1} parent=1 // pred_check
      _
    $region47: #{generator_forward.1} parent=1 // pred_check_branch
      %65 = sbr.rel (0) target = $region49
    $region48: #{generator_forward.1} parent=1 // pred_region
      %67 = vsyncadd [#allocation5], 0
      %s68 = sshll.u32 %s11, 4
      %s69 = int_to_ptr.hbm [resolvable:$true] %s68
      %s70 = sshll.u32 [#allocation6], 4
      %s71 = int_to_ptr.vmem [resolvable:$true] %s70
      %76 = dma.hbm_to_vmem [thread:$0]  %s69, 8192, %s71, [#allocation5], 128, 128, 8
    $region49: #{generator_forward.1} parent=1 // pred_fallthru
      _
    // Predicated region
    $region50: #{generator_forward.1} parent=1 // pred_check
      _
    $region51: #{generator_forward.1} parent=1 // pred_check_branch
      %78 = sbr.rel (0) target = $region53
    $region52: #{generator_forward.1} parent=1 // pred_region
      _
    $region53: #{generator_forward.1} parent=1 // pred_fallthru
      _
    // Predicated region
    $region54: #{generator_forward.1} parent=1 // pred_check
      _
    $region55: #{generator_forward.1} parent=1 // pred_check_branch
      %80 = sbr.rel (0) target = $region57
    $region56: #{generator_forward.1} parent=1 // pred_region
      %82 = dma.done [#allocation3], 2048
    $region57: #{generator_forward.1} parent=1 // pred_fallthru
      _
    // Predicated region
    $region58: #{generator_forward.1} parent=1 // pred_check
      _
    $region59: #{generator_forward.1} parent=1 // pred_check_branch
      %84 = sbr.rel (0) target = $region61
    $region60: #{generator_forward.1} parent=1 // pred_region
      %86 = dma.done [#allocation5], 8192
    $region61: #{generator_forward.1} parent=1 // pred_fallthru
      _
    // Predicated region
    $region62: #{generator_forward.1} parent=1 // pred_check
      _
    $region63: #{generator_forward.1} parent=1 // pred_check_branch
      %88 = sbr.rel (0) target = $region65
    $region64: #{generator_forward.1} parent=1 // pred_region
      %90 = dma.done [#allocation5], 8192
    $region65: #{generator_forward.1} parent=1 // pred_fallthru
      _
    %v92 = vld [vmem:[%s0] sm:$0xff]
    %v93 = vld [vmem:[%s0 + $0x8] sm:$0xff]
    %v94 = vld [vmem:[%s0 + $0x10] sm:$0xff]
    %v95 = vld [vmem:[%s0 + $0x18] sm:$0xff]
    %v96 = vld [vmem:[%s0 + $0x20] sm:$0xff]
    %v97 = vld [vmem:[%s0 + $0x28] sm:$0xff]
    %v98 = vld [vmem:[%s0 + $0x30] sm:$0xff]
    %v99 = vld [vmem:[%s0 + $0x38] sm:$0xff]
    %v100 = vld [vmem:[%s1] sm:$0xf]
    %v101 = vld [vmem:[%s1 + $0x4] sm:$0xf]
    %v102 = vld [vmem:[%s1 + $0x8] sm:$0xf]
    %v103 = vld [vmem:[%s1 + $0xc] sm:$0xf]
    %v104 = vpack.c.bf16 %v93, %v92
    %v105 = vpack.c.bf16 %v95, %v94
    %v106 = vpack.c.bf16 %v97, %v96
    %v107 = vpack.c.bf16 %v99, %v98
    %v108 = vld [vmem:[%s2] sm:$0x1]
    %v110 = vperm.slane %v108, 0
    %v116 = vunpack.c.l.b16 %v100
    %v117 = vunpack.c.l.b16 %v101
    %v118 = vunpack.c.l.b16 %v102
    %v119 = vunpack.c.l.b16 %v103
    %v120 = vpack.c.b16 %v117, %v116
    %v121 = vpack.c.b16 %v119, %v118
    %vm124 = vcmask 261120
    %v126 = vsel %vm124, %v104, 0
    %v129 = vsel %vm124, %v105, 0
    %v132 = vsel %vm124, %v106, 0
    %v135 = vsel %vm124, %v107, 0
    %137 = vmatpush.bf16.msra.mxu0 0
    %138 = vmatpush.bf16.msra.mxu0 0
    %139 = vmatpush.bf16.msra.mxu0 0
    %140 = vmatpush.bf16.msra.mxu0 0
    %141 = vmatpush.bf16.msra.mxu0 0
    %142 = vmatpush.bf16.msra.mxu0 0
    %143 = vmatpush.bf16.msra.mxu0 %v121
    %144 = vmatpush.bf16.msra.mxu0 %v120
    %145 = vmatmul.bf16.gmra.mxu0 %v126
    %v146 = vpop.f32.mrf.mxu0
    %v147 = vadd.f32 %v110, %v146
    %v148 = vpop.f32.mrf.mxu0
    %v149 = vadd.f32 %v110, %v148
    %150 = vmatmul.bf16.gmra.mxu0 %v129
    %v151 = vpop.f32.mrf.mxu0
    %v152 = vadd.f32 %v110, %v151
    %v153 = vpop.f32.mrf.mxu0
    %v154 = vadd.f32 %v110, %v153
    %155 = vmatmul.bf16.gmra.mxu0 %v132
    %v156 = vpop.f32.mrf.mxu0
    %v157 = vadd.f32 %v110, %v156
    %v158 = vpop.f32.mrf.mxu0
    %v159 = vadd.f32 %v110, %v158
    %160 = vmatmul.bf16.gmra.mxu0 %v135
    %v161 = vpop.f32.mrf.mxu0
    %v162 = vadd.f32 %v110, %v161
    %v163 = vpop.f32.mrf.mxu0
    %v164 = vadd.f32 %v110, %v163
    %165 = vdwg.mxu0
    %vm166 = vcmp.gt.f32.partialorder %v147, 0.0
    %vm167 = vcmp.gt.f32.partialorder %v149, 0.0
    %vm168 = vcmp.gt.f32.partialorder %v152, 0.0
    %vm169 = vcmp.gt.f32.partialorder %v154, 0.0
    %vm170 = vcmp.gt.f32.partialorder %v157, 0.0
    %vm171 = vcmp.gt.f32.partialorder %v159, 0.0
    %vm172 = vcmp.gt.f32.partialorder %v162, 0.0
    %vm173 = vcmp.gt.f32.partialorder %v164, 0.0
    %v174 = vmul.f32 %v147, 0.2
    %v175 = vmul.f32 %v149, 0.2
    %v176 = vmul.f32 %v152, 0.2
    %v177 = vmul.f32 %v154, 0.2
    %v178 = vmul.f32 %v157, 0.2
    %v179 = vmul.f32 %v159, 0.2
    %v180 = vmul.f32 %v162, 0.2
    %v181 = vmul.f32 %v164, 0.2
    %v182 = vsel %vm166, %v147, %v174
    %v183 = vsel %vm167, %v149, %v175
    %v184 = vsel %vm168, %v152, %v176
    %v185 = vsel %vm169, %v154, %v177
    %v186 = vsel %vm170, %v157, %v178
    %v187 = vsel %vm171, %v159, %v179
    %v188 = vsel %vm172, %v162, %v180
    %v189 = vsel %vm173, %v164, %v181
    %v190 = vld [vmem:[#allocation2] sm:$0xff]
    %v191 = vld [vmem:[#allocation2 + $0x8] sm:$0xff]
    %v192 = vld [vmem:[#allocation2 + $0x10] sm:$0xff]
    %v193 = vld [vmem:[#allocation2 + $0x18] sm:$0xff]
    %v194 = vld [vmem:[#allocation2 + $0x20] sm:$0xff]
    %v195 = vld [vmem:[#allocation2 + $0x28] sm:$0xff]
    %v196 = vld [vmem:[#allocation2 + $0x30] sm:$0xff]
    %v197 = vld [vmem:[#allocation2 + $0x38] sm:$0xff]
    %v198 = vld [vmem:[#allocation2 + $0x40] sm:$0xff]
    %v199 = vld [vmem:[#allocation2 + $0x48] sm:$0xff]
    %v200 = vld [vmem:[#allocation2 + $0x50] sm:$0xff]
    %v201 = vld [vmem:[#allocation2 + $0x58] sm:$0xff]
    %v202 = vld [vmem:[#allocation2 + $0x60] sm:$0xff]
    %v203 = vld [vmem:[#allocation2 + $0x68] sm:$0xff]
    %v204 = vld [vmem:[#allocation2 + $0x70] sm:$0xff]
    %v205 = vld [vmem:[#allocation2 + $0x78] sm:$0xff]
    %v206 = vpack.c.bf16 %v183, %v182
    %v207 = vpack.c.bf16 %v185, %v184
    %v208 = vpack.c.bf16 %v187, %v186
    %v209 = vpack.c.bf16 %v189, %v188
    %v210 = vld [vmem:[%s4] sm:$0x3]
    %v212 = vperm.slane %v210, 0
    %v213 = vperm.slane %v210, 1
    %v232 = vunpack.c.l.b16 %v190
    %v233 = vunpack.c.h.b16 %v190
    %v234 = vunpack.c.l.b16 %v191
    %v235 = vunpack.c.h.b16 %v191
    %v236 = vunpack.c.l.b16 %v192
    %v237 = vunpack.c.h.b16 %v192
    %v238 = vunpack.c.l.b16 %v193
    %v239 = vunpack.c.h.b16 %v193
    %v240 = vunpack.c.l.b16 %v194
    %v241 = vunpack.c.h.b16 %v194
    %v242 = vunpack.c.l.b16 %v195
    %v243 = vunpack.c.h.b16 %v195
    %v244 = vunpack.c.l.b16 %v196
    %v245 = vunpack.c.h.b16 %v196
    %v246 = vunpack.c.l.b16 %v197
    %v247 = vunpack.c.h.b16 %v197
    %v248 = vunpack.c.l.b16 %v198
    %v249 = vunpack.c.h.b16 %v198
    %v250 = vunpack.c.l.b16 %v199
    %v251 = vunpack.c.h.b16 %v199
    %v252 = vunpack.c.l.b16 %v200
    %v253 = vunpack.c.h.b16 %v200
    %v254 = vunpack.c.l.b16 %v201
    %v255 = vunpack.c.h.b16 %v201
    %v256 = vunpack.c.l.b16 %v202
    %v257 = vunpack.c.h.b16 %v202
    %v258 = vunpack.c.l.b16 %v203
    %v259 = vunpack.c.h.b16 %v203
    %v260 = vunpack.c.l.b16 %v204
    %v261 = vunpack.c.h.b16 %v204
    %v262 = vunpack.c.l.b16 %v205
    %v263 = vunpack.c.h.b16 %v205
    %v264 = vpack.c.b16 %v234, %v232
    %v265 = vpack.c.b16 %v235, %v233
    %v266 = vpack.c.b16 %v238, %v236
    %v267 = vpack.c.b16 %v239, %v237
    %v268 = vpack.c.b16 %v242, %v240
    %v269 = vpack.c.b16 %v243, %v241
    %v270 = vpack.c.b16 %v246, %v244
    %v271 = vpack.c.b16 %v247, %v245
    %v272 = vpack.c.b16 %v250, %v248
    %v273 = vpack.c.b16 %v251, %v249
    %v274 = vpack.c.b16 %v254, %v252
    %v275 = vpack.c.b16 %v255, %v253
    %v276 = vpack.c.b16 %v258, %v256
    %v277 = vpack.c.b16 %v259, %v257
    %v278 = vpack.c.b16 %v262, %v260
    %v279 = vpack.c.b16 %v263, %v261
    %296 = vmatpush.bf16.msra.mxu0 %v278
    %297 = vmatpush.bf16.msra.mxu0 %v276
    %298 = vmatpush.bf16.msra.mxu0 %v274
    %299 = vmatpush.bf16.msra.mxu0 %v272
    %300 = vmatpush.bf16.msra.mxu0 %v270
    %301 = vmatpush.bf16.msra.mxu0 %v268
    %302 = vmatpush.bf16.msra.mxu0 %v266
    %303 = vmatpush.bf16.msra.mxu0 %v264
    %304 = vmatmul.bf16.gmra.mxu0 %v206
    %v305 = vpop.f32.mrf.mxu0
    %v306 = vadd.f32 %v212, %v305
    %v307 = vpop.f32.mrf.mxu0
    %v308 = vadd.f32 %v212, %v307
    %309 = vmatmul.bf16.gmra.mxu0 %v207
    %v310 = vpop.f32.mrf.mxu0
    %v311 = vadd.f32 %v212, %v310
    %v312 = vpop.f32.mrf.mxu0
    %v313 = vadd.f32 %v212, %v312
    %314 = vmatmul.bf16.gmra.mxu0 %v208
    %v315 = vpop.f32.mrf.mxu0
    %v316 = vadd.f32 %v212, %v315
    %v317 = vpop.f32.mrf.mxu0
    %v318 = vadd.f32 %v212, %v317
    %319 = vmatmul.bf16.gmra.mxu0 %v209
    %v320 = vpop.f32.mrf.mxu0
    %v321 = vadd.f32 %v212, %v320
    %v322 = vpop.f32.mrf.mxu0
    %v323 = vadd.f32 %v212, %v322
    %324 = vdwg.mxu0
    %325 = vmatpush.bf16.msra.mxu0 %v279
    %326 = vmatpush.bf16.msra.mxu0 %v277
    %327 = vmatpush.bf16.msra.mxu0 %v275
    %328 = vmatpush.bf16.msra.mxu0 %v273
    %329 = vmatpush.bf16.msra.mxu0 %v271
    %330 = vmatpush.bf16.msra.mxu0 %v269
    %331 = vmatpush.bf16.msra.mxu0 %v267
    %332 = vmatpush.bf16.msra.mxu0 %v265
    %333 = vmatmul.bf16.gmra.mxu0 %v206
    %v334 = vpop.f32.mrf.mxu0
    %v335 = vadd.f32 %v213, %v334
    %v336 = vpop.f32.mrf.mxu0
    %v337 = vadd.f32 %v213, %v336
    %338 = vmatmul.bf16.gmra.mxu0 %v207
    %v339 = vpop.f32.mrf.mxu0
    %v340 = vadd.f32 %v213, %v339
    %v341 = vpop.f32.mrf.mxu0
    %v342 = vadd.f32 %v213, %v341
    %343 = vmatmul.bf16.gmra.mxu0 %v208
    %v344 = vpop.f32.mrf.mxu0
    %v345 = vadd.f32 %v213, %v344
    %v346 = vpop.f32.mrf.mxu0
    %v347 = vadd.f32 %v213, %v346
    %348 = vmatmul.bf16.gmra.mxu0 %v209
    %v349 = vpop.f32.mrf.mxu0
    %v350 = vadd.f32 %v213, %v349
    %v351 = vpop.f32.mrf.mxu0
    %v352 = vadd.f32 %v213, %v351
    %353 = vdwg.mxu0
    %v354 = vld [vmem:[%s5] sm:$0x3]
    %v355 = vld [vmem:[%s6] sm:$0x3]
    %v356 = vadd.f32 %v306, %v308
    %v357 = vadd.f32 %v356, %v311
    %v358 = vadd.f32 %v357, %v313
    %v359 = vadd.f32 %v358, %v316
    %v360 = vadd.f32 %v359, %v318
    %v361 = vadd.f32 %v360, %v321
    %v362 = vadd.f32 %v361, %v323
    %v363 = vrot.slane %v362, 4
    %v364 = vadd.f32 %v362, %v363
    %v365 = vrot.slane %v364, 2
    %v366 = vadd.f32 %v364, %v365
    %v367 = vrot.slane %v366, 1
    %v368 = vadd.f32 %v366, %v367
    %v369 = vadd.f32 %v335, %v337
    %v370 = vadd.f32 %v369, %v340
    %v371 = vadd.f32 %v370, %v342
    %v372 = vadd.f32 %v371, %v345
    %v373 = vadd.f32 %v372, %v347
    %v374 = vadd.f32 %v373, %v350
    %v375 = vadd.f32 %v374, %v352
    %v376 = vrot.slane %v375, 4
    %v377 = vadd.f32 %v375, %v376
    %v378 = vrot.slane %v377, 2
    %v379 = vadd.f32 %v377, %v378
    %v380 = vrot.slane %v379, 1
    %v381 = vadd.f32 %v379, %v380
    %v382 = vrcp.pop 64.0
    %v383 = vmul.f32 64.0, %v382
    %v384 = vsub.f32 1.0, %v383
    %v385 = vmul.f32 %v382, %v384
    %v386 = vadd.f32 %v382, %v385
    %vm387 = vweird.f32 %v382
    %v388 = vsel %vm387, %v382, %v386
    %v389 = vmul.f32 %v368, %v388
    %v390 = vmul.f32 %v381, %v388
    %v391 = vsub.f32 %v306, %v389
    %v392 = vsub.f32 %v335, %v390
    %v393 = vsub.f32 %v308, %v389
    %v394 = vsub.f32 %v337, %v390
    %v395 = vsub.f32 %v311, %v389
    %v396 = vsub.f32 %v340, %v390
    %v397 = vsub.f32 %v313, %v389
    %v398 = vsub.f32 %v342, %v390
    %v399 = vsub.f32 %v316, %v389
    %v400 = vsub.f32 %v345, %v390
    %v401 = vsub.f32 %v318, %v389
    %v402 = vsub.f32 %v347, %v390
    %v403 = vsub.f32 %v321, %v389
    %v404 = vsub.f32 %v350, %v390
    %v405 = vsub.f32 %v323, %v389
    %v406 = vsub.f32 %v352, %v390
    %v407 = vmul.f32 %v391, %v391
    %v408 = vmul.f32 %v392, %v392
    %v409 = vmul.f32 %v393, %v393
    %v410 = vmul.f32 %v394, %v394
    %v411 = vmul.f32 %v395, %v395
    %v412 = vmul.f32 %v396, %v396
    %v413 = vmul.f32 %v397, %v397
    %v414 = vmul.f32 %v398, %v398
    %v415 = vmul.f32 %v399, %v399
    %v416 = vmul.f32 %v400, %v400
    %v417 = vmul.f32 %v401, %v401
    %v418 = vmul.f32 %v402, %v402
    %v419 = vmul.f32 %v403, %v403
    %v420 = vmul.f32 %v404, %v404
    %v421 = vmul.f32 %v405, %v405
    %v422 = vmul.f32 %v406, %v406
    %v423 = vadd.f32 %v407, %v409
    %v424 = vadd.f32 %v423, %v411
    %v425 = vadd.f32 %v424, %v413
    %v426 = vadd.f32 %v425, %v415
    %v427 = vadd.f32 %v426, %v417
    %v428 = vadd.f32 %v427, %v419
    %v429 = vadd.f32 %v428, %v421
    %v430 = vrot.slane %v429, 4
    %v431 = vadd.f32 %v429, %v430
    %v432 = vrot.slane %v431, 2
    %v433 = vadd.f32 %v431, %v432
    %v434 = vrot.slane %v433, 1
    %v435 = vadd.f32 %v433, %v434
    %v436 = vadd.f32 %v408, %v410
    %v437 = vadd.f32 %v436, %v412
    %v438 = vadd.f32 %v437, %v414
    %v439 = vadd.f32 %v438, %v416
    %v440 = vadd.f32 %v439, %v418
    %v441 = vadd.f32 %v440, %v420
    %v442 = vadd.f32 %v441, %v422
    %v443 = vrot.slane %v442, 4
    %v444 = vadd.f32 %v442, %v443
    %v445 = vrot.slane %v444, 2
    %v446 = vadd.f32 %v444, %v445
    %v447 = vrot.slane %v446, 1
    %v448 = vadd.f32 %v446, %v447
    %v449 = vmul.f32 %v435, %v388
    %v450 = vmul.f32 %v448, %v388
    %v451 = vadd.f32 %v449, 0.8
    %v452 = vadd.f32 %v450, 0.8
    %v453 = vrsqrt.pop %v451
    %v454 = vmul.f32 %v453, %v451
    %v455 = vmul.f32 %v454, %v453
    %v456 = vmul.f32 0.5, %v455
    %v457 = vsub.f32 1.5, %v456
    %v458 = vmul.f32 %v453, %v457
    %vm459 = vweird.f32 %v451
    %vm460 = vweird.f32 %v453
    %vm461 = vmor %vm459, %vm460
    %v462 = vsel %vm461, %v453, %v458
    %v463 = vrsqrt.pop %v452
    %v464 = vmul.f32 %v463, %v452
    %v465 = vmul.f32 %v464, %v463
    %v466 = vmul.f32 0.5, %v465
    %v467 = vsub.f32 1.5, %v466
    %v468 = vmul.f32 %v463, %v467
    %vm469 = vweird.f32 %v452
    %vm470 = vweird.f32 %v463
    %vm471 = vmor %vm469, %vm470
    %v472 = vsel %vm471, %v463, %v468
    %v475 = vrot.slane %v472, 7
    %vm476 = vcmask 1040384
    %v477 = vsel %vm476, %v462, %v475
    %v479 = vmul.f32 %v354, %v477
    %v481 = vperm.slane %v479, 0
    %v482 = vperm.slane %v479, 1
    %v485 = vmul.f32 %v391, %v481
    %v486 = vmul.f32 %v392, %v482
    %v487 = vmul.f32 %v393, %v481
    %v488 = vmul.f32 %v394, %v482
    %v489 = vmul.f32 %v395, %v481
    %v490 = vmul.f32 %v396, %v482
    %v491 = vmul.f32 %v397, %v481
    %v492 = vmul.f32 %v398, %v482
    %v493 = vmul.f32 %v399, %v481
    %v494 = vmul.f32 %v400, %v482
    %v495 = vmul.f32 %v401, %v481
    %v496 = vmul.f32 %v402, %v482
    %v497 = vmul.f32 %v403, %v481
    %v498 = vmul.f32 %v404, %v482
    %v499 = vmul.f32 %v405, %v481
    %v500 = vmul.f32 %v406, %v482
    %v502 = vperm.slane %v355, 0
    %v503 = vperm.slane %v355, 1
    %v506 = vadd.f32 %v485, %v502
    %v507 = vadd.f32 %v486, %v503
    %v508 = vadd.f32 %v487, %v502
    %v509 = vadd.f32 %v488, %v503
    %v510 = vadd.f32 %v489, %v502
    %v511 = vadd.f32 %v490, %v503
    %v512 = vadd.f32 %v491, %v502
    %v513 = vadd.f32 %v492, %v503
    %v514 = vadd.f32 %v493, %v502
    %v515 = vadd.f32 %v494, %v503
    %v516 = vadd.f32 %v495, %v502
    %v517 = vadd.f32 %v496, %v503
    %v518 = vadd.f32 %v497, %v502
    %v519 = vadd.f32 %v498, %v503
    %v520 = vadd.f32 %v499, %v502
    %v521 = vadd.f32 %v500, %v503
    %vm522 = vcmp.gt.f32.partialorder %v506, 0.0
    %vm523 = vcmp.gt.f32.partialorder %v507, 0.0
    %vm524 = vcmp.gt.f32.partialorder %v508, 0.0
    %vm525 = vcmp.gt.f32.partialorder %v509, 0.0
    %vm526 = vcmp.gt.f32.partialorder %v510, 0.0
    %vm527 = vcmp.gt.f32.partialorder %v511, 0.0
    %vm528 = vcmp.gt.f32.partialorder %v512, 0.0
    %vm529 = vcmp.gt.f32.partialorder %v513, 0.0
    %vm530 = vcmp.gt.f32.partialorder %v514, 0.0
    %vm531 = vcmp.gt.f32.partialorder %v515, 0.0
    %vm532 = vcmp.gt.f32.partialorder %v516, 0.0
    %vm533 = vcmp.gt.f32.partialorder %v517, 0.0
    %vm534 = vcmp.gt.f32.partialorder %v518, 0.0
    %vm535 = vcmp.gt.f32.partialorder %v519, 0.0
    %vm536 = vcmp.gt.f32.partialorder %v520, 0.0
    %vm537 = vcmp.gt.f32.partialorder %v521, 0.0
    %v538 = vmul.f32 %v506, 0.2
    %v539 = vmul.f32 %v507, 0.2
    %v540 = vmul.f32 %v508, 0.2
    %v541 = vmul.f32 %v509, 0.2
    %v542 = vmul.f32 %v510, 0.2
    %v543 = vmul.f32 %v511, 0.2
    %v544 = vmul.f32 %v512, 0.2
    %v545 = vmul.f32 %v513, 0.2
    %v546 = vmul.f32 %v514, 0.2
    %v547 = vmul.f32 %v515, 0.2
    %v548 = vmul.f32 %v516, 0.2
    %v549 = vmul.f32 %v517, 0.2
    %v550 = vmul.f32 %v518, 0.2
    %v551 = vmul.f32 %v519, 0.2
    %v552 = vmul.f32 %v520, 0.2
    %v553 = vmul.f32 %v521, 0.2
    %v554 = vsel %vm522, %v506, %v538
    %v555 = vsel %vm523, %v507, %v539
    %v556 = vsel %vm524, %v508, %v540
    %v557 = vsel %vm525, %v509, %v541
    %v558 = vsel %vm526, %v510, %v542
    %v559 = vsel %vm527, %v511, %v543
    %v560 = vsel %vm528, %v512, %v544
    %v561 = vsel %vm529, %v513, %v545
    %v562 = vsel %vm530, %v514, %v546
    %v563 = vsel %vm531, %v515, %v547
    %v564 = vsel %vm532, %v516, %v548
    %v565 = vsel %vm533, %v517, %v549
    %v566 = vsel %vm534, %v518, %v550
    %v567 = vsel %vm535, %v519, %v551
    %v568 = vsel %vm536, %v520, %v552
    %v569 = vsel %vm537, %v521, %v553
    %v570 = vld [vmem:[#allocation4] sm:$0xff]
    %v571 = vld [vmem:[#allocation4 + $0x8] sm:$0xff]
    %v572 = vld [vmem:[#allocation4 + $0x10] sm:$0xff]
    %v573 = vld [vmem:[#allocation4 + $0x18] sm:$0xff]
    %v574 = vld [vmem:[#allocation4 + $0x20] sm:$0xff]
    %v575 = vld [vmem:[#allocation4 + $0x28] sm:$0xff]
    %v576 = vld [vmem:[#allocation4 + $0x30] sm:$0xff]
    %v577 = vld [vmem:[#allocation4 + $0x38] sm:$0xff]
    %v578 = vld [vmem:[#allocation4 + $0x40] sm:$0xff]
    %v579 = vld [vmem:[#allocation4 + $0x48] sm:$0xff]
    %v580 = vld [vmem:[#allocation4 + $0x50] sm:$0xff]
    %v581 = vld [vmem:[#allocation4 + $0x58] sm:$0xff]
    %v582 = vld [vmem:[#allocation4 + $0x60] sm:$0xff]
    %v583 = vld [vmem:[#allocation4 + $0x68] sm:$0xff]
    %v584 = vld [vmem:[#allocation4 + $0x70] sm:$0xff]
    %v585 = vld [vmem:[#allocation4 + $0x78] sm:$0xff]
    %v586 = vld [vmem:[#allocation4 + $0x80] sm:$0xff]
    %v587 = vld [vmem:[#allocation4 + $0x88] sm:$0xff]
    %v588 = vld [vmem:[#allocation4 + $0x90] sm:$0xff]
    %v589 = vld [vmem:[#allocation4 + $0x98] sm:$0xff]
    %v590 = vld [vmem:[#allocation4 + $0xa0] sm:$0xff]
    %v591 = vld [vmem:[#allocation4 + $0xa8] sm:$0xff]
    %v592 = vld [vmem:[#allocation4 + $0xb0] sm:$0xff]
    %v593 = vld [vmem:[#allocation4 + $0xb8] sm:$0xff]
    %v594 = vld [vmem:[#allocation4 + $0xc0] sm:$0xff]
    %v595 = vld [vmem:[#allocation4 + $0xc8] sm:$0xff]
    %v596 = vld [vmem:[#allocation4 + $0xd0] sm:$0xff]
    %v597 = vld [vmem:[#allocation4 + $0xd8] sm:$0xff]
    %v598 = vld [vmem:[#allocation4 + $0xe0] sm:$0xff]
    %v599 = vld [vmem:[#allocation4 + $0xe8] sm:$0xff]
    %v600 = vld [vmem:[#allocation4 + $0xf0] sm:$0xff]
    %v601 = vld [vmem:[#allocation4 + $0xf8] sm:$0xff]
    %v602 = vld [vmem:[#allocation4 + $0x100] sm:$0xff]
    %v603 = vld [vmem:[#allocation4 + $0x108] sm:$0xff]
    %v604 = vld [vmem:[#allocation4 + $0x110] sm:$0xff]
    %v605 = vld [vmem:[#allocation4 + $0x118] sm:$0xff]
    %v606 = vld [vmem:[#allocation4 + $0x120] sm:$0xff]
    %v607 = vld [vmem:[#allocation4 + $0x128] sm:$0xff]
    %v608 = vld [vmem:[#allocation4 + $0x130] sm:$0xff]
    %v609 = vld [vmem:[#allocation4 + $0x138] sm:$0xff]
    %v610 = vld [vmem:[#allocation4 + $0x140] sm:$0xff]
    %v611 = vld [vmem:[#allocation4 + $0x148] sm:$0xff]
    %v612 = vld [vmem:[#allocation4 + $0x150] sm:$0xff]
    %v613 = vld [vmem:[#allocation4 + $0x158] sm:$0xff]
    %v614 = vld [vmem:[#allocation4 + $0x160] sm:$0xff]
    %v615 = vld [vmem:[#allocation4 + $0x168] sm:$0xff]
    %v616 = vld [vmem:[#allocation4 + $0x170] sm:$0xff]
    %v617 = vld [vmem:[#allocation4 + $0x178] sm:$0xff]
    %v618 = vld [vmem:[#allocation4 + $0x180] sm:$0xff]
    %v619 = vld [vmem:[#allocation4 + $0x188] sm:$0xff]
    %v620 = vld [vmem:[#allocation4 + $0x190] sm:$0xff]
    %v621 = vld [vmem:[#allocation4 + $0x198] sm:$0xff]
    %v622 = vld [vmem:[#allocation4 + $0x1a0] sm:$0xff]
    %v623 = vld [vmem:[#allocation4 + $0x1a8] sm:$0xff]
    %v624 = vld [vmem:[#allocation4 + $0x1b0] sm:$0xff]
    %v625 = vld [vmem:[#allocation4 + $0x1b8] sm:$0xff]
    %v626 = vld [vmem:[#allocation4 + $0x1c0] sm:$0xff]
    %v627 = vld [vmem:[#allocation4 + $0x1c8] sm:$0xff]
    %v628 = vld [vmem:[#allocation4 + $0x1d0] sm:$0xff]
    %v629 = vld [vmem:[#allocation4 + $0x1d8] sm:$0xff]
    %v630 = vld [vmem:[#allocation4 + $0x1e0] sm:$0xff]
    %v631 = vld [vmem:[#allocation4 + $0x1e8] sm:$0xff]
    %v632 = vld [vmem:[#allocation4 + $0x1f0] sm:$0xff]
    %v633 = vld [vmem:[#allocation4 + $0x1f8] sm:$0xff]
    %v634 = vpack.c.bf16 %v556, %v554
    %v635 = vpack.c.bf16 %v557, %v555
    %v636 = vpack.c.bf16 %v560, %v558
    %v637 = vpack.c.bf16 %v561, %v559
    %v638 = vpack.c.bf16 %v564, %v562
    %v639 = vpack.c.bf16 %v565, %v563
    %v640 = vpack.c.bf16 %v568, %v566
    %v641 = vpack.c.bf16 %v569, %v567
    %v642 = vld [vmem:[%s8] sm:$0xf]
    %v644 = vperm.slane %v642, 0
    %v645 = vperm.slane %v642, 1
    %v646 = vperm.slane %v642, 2
    %v647 = vperm.slane %v642, 3
    %v716 = vunpack.c.l.b16 %v570
    %v717 = vunpack.c.h.b16 %v570
    %v718 = vunpack.c.l.b16 %v571
    %v719 = vunpack.c.h.b16 %v571
    %v720 = vunpack.c.l.b16 %v572
    %v721 = vunpack.c.h.b16 %v572
    %v722 = vunpack.c.l.b16 %v573
    %v723 = vunpack.c.h.b16 %v573
    %v724 = vunpack.c.l.b16 %v574
    %v725 = vunpack.c.h.b16 %v574
    %v726 = vunpack.c.l.b16 %v575
    %v727 = vunpack.c.h.b16 %v575
    %v728 = vunpack.c.l.b16 %v576
    %v729 = vunpack.c.h.b16 %v576
    %v730 = vunpack.c.l.b16 %v577
    %v731 = vunpack.c.h.b16 %v577
    %v732 = vunpack.c.l.b16 %v578
    %v733 = vunpack.c.h.b16 %v578
    %v734 = vunpack.c.l.b16 %v579
    %v735 = vunpack.c.h.b16 %v579
    %v736 = vunpack.c.l.b16 %v580
    %v737 = vunpack.c.h.b16 %v580
    %v738 = vunpack.c.l.b16 %v581
    %v739 = vunpack.c.h.b16 %v581
    %v740 = vunpack.c.l.b16 %v582
    %v741 = vunpack.c.h.b16 %v582
    %v742 = vunpack.c.l.b16 %v583
    %v743 = vunpack.c.h.b16 %v583
    %v744 = vunpack.c.l.b16 %v584
    %v745 = vunpack.c.h.b16 %v584
    %v746 = vunpack.c.l.b16 %v585
    %v747 = vunpack.c.h.b16 %v585
    %v748 = vunpack.c.l.b16 %v586
    %v749 = vunpack.c.h.b16 %v586
    %v750 = vunpack.c.l.b16 %v587
    %v751 = vunpack.c.h.b16 %v587
    %v752 = vunpack.c.l.b16 %v588
    %v753 = vunpack.c.h.b16 %v588
    %v754 = vunpack.c.l.b16 %v589
    %v755 = vunpack.c.h.b16 %v589
    %v756 = vunpack.c.l.b16 %v590
    %v757 = vunpack.c.h.b16 %v590
    %v758 = vunpack.c.l.b16 %v591
    %v759 = vunpack.c.h.b16 %v591
    %v760 = vunpack.c.l.b16 %v592
    %v761 = vunpack.c.h.b16 %v592
    %v762 = vunpack.c.l.b16 %v593
    %v763 = vunpack.c.h.b16 %v593
    %v764 = vunpack.c.l.b16 %v594
    %v765 = vunpack.c.h.b16 %v594
    %v766 = vunpack.c.l.b16 %v595
    %v767 = vunpack.c.h.b16 %v595
    %v768 = vunpack.c.l.b16 %v596
    %v769 = vunpack.c.h.b16 %v596
    %v770 = vunpack.c.l.b16 %v597
    %v771 = vunpack.c.h.b16 %v597
    %v772 = vunpack.c.l.b16 %v598
    %v773 = vunpack.c.h.b16 %v598
    %v774 = vunpack.c.l.b16 %v599
    %v775 = vunpack.c.h.b16 %v599
    %v776 = vunpack.c.l.b16 %v600
    %v777 = vunpack.c.h.b16 %v600
    %v778 = vunpack.c.l.b16 %v601
    %v779 = vunpack.c.h.b16 %v601
    %v780 = vunpack.c.l.b16 %v602
    %v781 = vunpack.c.h.b16 %v602
    %v782 = vunpack.c.l.b16 %v603
    %v783 = vunpack.c.h.b16 %v603
    %v784 = vunpack.c.l.b16 %v604
    %v785 = vunpack.c.h.b16 %v604
    %v786 = vunpack.c.l.b16 %v605
    %v787 = vunpack.c.h.b16 %v605
    %v788 = vunpack.c.l.b16 %v606
    %v789 = vunpack.c.h.b16 %v606
    %v790 = vunpack.c.l.b16 %v607
    %v791 = vunpack.c.h.b16 %v607
    %v792 = vunpack.c.l.b16 %v608
    %v793 = vunpack.c.h.b16 %v608
    %v794 = vunpack.c.l.b16 %v609
    %v795 = vunpack.c.h.b16 %v609
    %v796 = vunpack.c.l.b16 %v610
    %v797 = vunpack.c.h.b16 %v610
    %v798 = vunpack.c.l.b16 %v611
    %v799 = vunpack.c.h.b16 %v611
    %v800 = vunpack.c.l.b16 %v612
    %v801 = vunpack.c.h.b16 %v612
    %v802 = vunpack.c.l.b16 %v613
    %v803 = vunpack.c.h.b16 %v613
    %v804 = vunpack.c.l.b16 %v614
    %v805 = vunpack.c.h.b16 %v614
    %v806 = vunpack.c.l.b16 %v615
    %v807 = vunpack.c.h.b16 %v615
    %v808 = vunpack.c.l.b16 %v616
    %v809 = vunpack.c.h.b16 %v616
    %v810 = vunpack.c.l.b16 %v617
    %v811 = vunpack.c.h.b16 %v617
    %v812 = vunpack.c.l.b16 %v618
    %v813 = vunpack.c.h.b16 %v618
    %v814 = vunpack.c.l.b16 %v619
    %v815 = vunpack.c.h.b16 %v619
    %v816 = vunpack.c.l.b16 %v620
    %v817 = vunpack.c.h.b16 %v620
    %v818 = vunpack.c.l.b16 %v621
    %v819 = vunpack.c.h.b16 %v621
    %v820 = vunpack.c.l.b16 %v622
    %v821 = vunpack.c.h.b16 %v622
    %v822 = vunpack.c.l.b16 %v623
    %v823 = vunpack.c.h.b16 %v623
    %v824 = vunpack.c.l.b16 %v624
    %v825 = vunpack.c.h.b16 %v624
    %v826 = vunpack.c.l.b16 %v625
    %v827 = vunpack.c.h.b16 %v625
    %v828 = vunpack.c.l.b16 %v626
    %v829 = vunpack.c.h.b16 %v626
    %v830 = vunpack.c.l.b16 %v627
    %v831 = vunpack.c.h.b16 %v627
    %v832 = vunpack.c.l.b16 %v628
    %v833 = vunpack.c.h.b16 %v628
    %v834 = vunpack.c.l.b16 %v629
    %v835 = vunpack.c.h.b16 %v629
    %v836 = vunpack.c.l.b16 %v630
    %v837 = vunpack.c.h.b16 %v630
    %v838 = vunpack.c.l.b16 %v631
    %v839 = vunpack.c.h.b16 %v631
    %v840 = vunpack.c.l.b16 %v632
    %v841 = vunpack.c.h.b16 %v632
    %v842 = vunpack.c.l.b16 %v633
    %v843 = vunpack.c.h.b16 %v633
    %v844 = vpack.c.b16 %v720, %v716
    %v845 = vpack.c.b16 %v721, %v717
    %v846 = vpack.c.b16 %v722, %v718
    %v847 = vpack.c.b16 %v723, %v719
    %v848 = vpack.c.b16 %v728, %v724
    %v849 = vpack.c.b16 %v729, %v725
    %v850 = vpack.c.b16 %v730, %v726
    %v851 = vpack.c.b16 %v731, %v727
    %v852 = vpack.c.b16 %v736, %v732
    %v853 = vpack.c.b16 %v737, %v733
    %v854 = vpack.c.b16 %v738, %v734
    %v855 = vpack.c.b16 %v739, %v735
    %v856 = vpack.c.b16 %v744, %v740
    %v857 = vpack.c.b16 %v745, %v741
    %v858 = vpack.c.b16 %v746, %v742
    %v859 = vpack.c.b16 %v747, %v743
    %v860 = vpack.c.b16 %v752, %v748
    %v861 = vpack.c.b16 %v753, %v749
    %v862 = vpack.c.b16 %v754, %v750
    %v863 = vpack.c.b16 %v755, %v751
    %v864 = vpack.c.b16 %v760, %v756
    %v865 = vpack.c.b16 %v761, %v757
    %v866 = vpack.c.b16 %v762, %v758
    %v867 = vpack.c.b16 %v763, %v759
    %v868 = vpack.c.b16 %v768, %v764
    %v869 = vpack.c.b16 %v769, %v765
    %v870 = vpack.c.b16 %v770, %v766
    %v871 = vpack.c.b16 %v771, %v767
    %v872 = vpack.c.b16 %v776, %v772
    %v873 = vpack.c.b16 %v777, %v773
    %v874 = vpack.c.b16 %v778, %v774
    %v875 = vpack.c.b16 %v779, %v775
    %v876 = vpack.c.b16 %v784, %v780
    %v877 = vpack.c.b16 %v785, %v781
    %v878 = vpack.c.b16 %v786, %v782
    %v879 = vpack.c.b16 %v787, %v783
    %v880 = vpack.c.b16 %v792, %v788
    %v881 = vpack.c.b16 %v793, %v789
    %v882 = vpack.c.b16 %v794, %v790
    %v883 = vpack.c.b16 %v795, %v791
    %v884 = vpack.c.b16 %v800, %v796
    %v885 = vpack.c.b16 %v801, %v797
    %v886 = vpack.c.b16 %v802, %v798
    %v887 = vpack.c.b16 %v803, %v799
    %v888 = vpack.c.b16 %v808, %v804
    %v889 = vpack.c.b16 %v809, %v805
    %v890 = vpack.c.b16 %v810, %v806
    %v891 = vpack.c.b16 %v811, %v807
    %v892 = vpack.c.b16 %v816, %v812
    %v893 = vpack.c.b16 %v817, %v813
    %v894 = vpack.c.b16 %v818, %v814
    %v895 = vpack.c.b16 %v819, %v815
    %v896 = vpack.c.b16 %v824, %v820
    %v897 = vpack.c.b16 %v825, %v821
    %v898 = vpack.c.b16 %v826, %v822
    %v899 = vpack.c.b16 %v827, %v823
    %v900 = vpack.c.b16 %v832, %v828
    %v901 = vpack.c.b16 %v833, %v829
    %v902 = vpack.c.b16 %v834, %v830
    %v903 = vpack.c.b16 %v835, %v831
    %v904 = vpack.c.b16 %v840, %v836
    %v905 = vpack.c.b16 %v841, %v837
    %v906 = vpack.c.b16 %v842, %v838
    %v907 = vpack.c.b16 %v843, %v839
    %972 = vmatpush.bf16.msra.mxu0 %v872
    %973 = vmatpush.bf16.msra.mxu0 %v868
    %974 = vmatpush.bf16.msra.mxu0 %v864
    %975 = vmatpush.bf16.msra.mxu0 %v860
    %976 = vmatpush.bf16.msra.mxu0 %v856
    %977 = vmatpush.bf16.msra.mxu0 %v852
    %978 = vmatpush.bf16.msra.mxu0 %v848
    %979 = vmatpush.bf16.msra.mxu0 %v844
    %980 = vmatmul.bf16.gmra.mxu0 %v634
    %v981 = vpop.f32.mrf.mxu0
    %v982 = vadd.f32 %v644, %v981
    %v983 = vpop.f32.mrf.mxu0
    %v984 = vadd.f32 %v644, %v983
    %985 = vmatmul.bf16.gmra.mxu0 %v636
    %v986 = vpop.f32.mrf.mxu0
    %v987 = vadd.f32 %v644, %v986
    %v988 = vpop.f32.mrf.mxu0
    %v989 = vadd.f32 %v644, %v988
    %990 = vmatmul.bf16.gmra.mxu0 %v638
    %v991 = vpop.f32.mrf.mxu0
    %v992 = vadd.f32 %v644, %v991
    %v993 = vpop.f32.mrf.mxu0
    %v994 = vadd.f32 %v644, %v993
    %995 = vmatmul.bf16.gmra.mxu0 %v640
    %v996 = vpop.f32.mrf.mxu0
    %v997 = vadd.f32 %v644, %v996
    %v998 = vpop.f32.mrf.mxu0
    %v999 = vadd.f32 %v644, %v998
    %1000 = vdwg.mxu0
    %1001 = vmatpush.bf16.msra.mxu0 %v904
    %1002 = vmatpush.bf16.msra.mxu0 %v900
    %1003 = vmatpush.bf16.msra.mxu0 %v896
    %1004 = vmatpush.bf16.msra.mxu0 %v892
    %1005 = vmatpush.bf16.msra.mxu0 %v888
    %1006 = vmatpush.bf16.msra.mxu0 %v884
    %1007 = vmatpush.bf16.msra.mxu0 %v880
    %1008 = vmatpush.bf16.msra.mxu0 %v876
    %1009 = vmatmul.bf16.gmra.mxu0 %v635
    %v1010 = vpop.f32.mrf.mxu0
    %v1011 = vadd.f32 %v982, %v1010
    %v1012 = vpop.f32.mrf.mxu0
    %v1013 = vadd.f32 %v984, %v1012
    %1014 = vmatmul.bf16.gmra.mxu0 %v637
    %v1015 = vpop.f32.mrf.mxu0
    %v1016 = vadd.f32 %v987, %v1015
    %v1017 = vpop.f32.mrf.mxu0
    %v1018 = vadd.f32 %v989, %v1017
    %1019 = vmatmul.bf16.gmra.mxu0 %v639
    %v1020 = vpop.f32.mrf.mxu0
    %v1021 = vadd.f32 %v992, %v1020
    %v1022 = vpop.f32.mrf.mxu0
    %v1023 = vadd.f32 %v994, %v1022
    %1024 = vmatmul.bf16.gmra.mxu0 %v641
    %v1025 = vpop.f32.mrf.mxu0
    %v1026 = vadd.f32 %v997, %v1025
    %v1027 = vpop.f32.mrf.mxu0
    %v1028 = vadd.f32 %v999, %v1027
    %1029 = vdwg.mxu0
    %1030 = vmatpush.bf16.msra.mxu0 %v873
    %1031 = vmatpush.bf16.msra.mxu0 %v869
    %1032 = vmatpush.bf16.msra.mxu0 %v865
    %1033 = vmatpush.bf16.msra.mxu0 %v861
    %1034 = vmatpush.bf16.msra.mxu0 %v857
    %1035 = vmatpush.bf16.msra.mxu0 %v853
    %1036 = vmatpush.bf16.msra.mxu0 %v849
    %1037 = vmatpush.bf16.msra.mxu0 %v845
    %1038 = vmatmul.bf16.gmra.mxu0 %v634
    %v1039 = vpop.f32.mrf.mxu0
    %v1040 = vadd.f32 %v645, %v1039
    %v1041 = vpop.f32.mrf.mxu0
    %v1042 = vadd.f32 %v645, %v1041
    %1043 = vmatmul.bf16.gmra.mxu0 %v636
    %v1044 = vpop.f32.mrf.mxu0
    %v1045 = vadd.f32 %v645, %v1044
    %v1046 = vpop.f32.mrf.mxu0
    %v1047 = vadd.f32 %v645, %v1046
    %1048 = vmatmul.bf16.gmra.mxu0 %v638
    %v1049 = vpop.f32.mrf.mxu0
    %v1050 = vadd.f32 %v645, %v1049
    %v1051 = vpop.f32.mrf.mxu0
    %v1052 = vadd.f32 %v645, %v1051
    %1053 = vmatmul.bf16.gmra.mxu0 %v640
    %v1054 = vpop.f32.mrf.mxu0
    %v1055 = vadd.f32 %v645, %v1054
    %v1056 = vpop.f32.mrf.mxu0
    %v1057 = vadd.f32 %v645, %v1056
    %1058 = vdwg.mxu0
    %1059 = vmatpush.bf16.msra.mxu0 %v905
    %1060 = vmatpush.bf16.msra.mxu0 %v901
    %1061 = vmatpush.bf16.msra.mxu0 %v897
    %1062 = vmatpush.bf16.msra.mxu0 %v893
    %1063 = vmatpush.bf16.msra.mxu0 %v889
    %1064 = vmatpush.bf16.msra.mxu0 %v885
    %1065 = vmatpush.bf16.msra.mxu0 %v881
    %1066 = vmatpush.bf16.msra.mxu0 %v877
    %1067 = vmatmul.bf16.gmra.mxu0 %v635
    %v1068 = vpop.f32.mrf.mxu0
    %v1069 = vadd.f32 %v1040, %v1068
    %v1070 = vpop.f32.mrf.mxu0
    %v1071 = vadd.f32 %v1042, %v1070
    %1072 = vmatmul.bf16.gmra.mxu0 %v637
    %v1073 = vpop.f32.mrf.mxu0
    %v1074 = vadd.f32 %v1045, %v1073
    %v1075 = vpop.f32.mrf.mxu0
    %v1076 = vadd.f32 %v1047, %v1075
    %1077 = vmatmul.bf16.gmra.mxu0 %v639
    %v1078 = vpop.f32.mrf.mxu0
    %v1079 = vadd.f32 %v1050, %v1078
    %v1080 = vpop.f32.mrf.mxu0
    %v1081 = vadd.f32 %v1052, %v1080
    %1082 = vmatmul.bf16.gmra.mxu0 %v641
    %v1083 = vpop.f32.mrf.mxu0
    %v1084 = vadd.f32 %v1055, %v1083
    %v1085 = vpop.f32.mrf.mxu0
    %v1086 = vadd.f32 %v1057, %v1085
    %1087 = vdwg.mxu0
    %1088 = vmatpush.bf16.msra.mxu0 %v874
    %1089 = vmatpush.bf16.msra.mxu0 %v870
    %1090 = vmatpush.bf16.msra.mxu0 %v866
    %1091 = vmatpush.bf16.msra.mxu0 %v862
    %1092 = vmatpush.bf16.msra.mxu0 %v858
    %1093 = vmatpush.bf16.msra.mxu0 %v854
    %1094 = vmatpush.bf16.msra.mxu0 %v850
    %1095 = vmatpush.bf16.msra.mxu0 %v846
    %1096 = vmatmul.bf16.gmra.mxu0 %v634
    %v1097 = vpop.f32.mrf.mxu0
    %v1098 = vadd.f32 %v646, %v1097
    %v1099 = vpop.f32.mrf.mxu0
    %v1100 = vadd.f32 %v646, %v1099
    %1101 = vmatmul.bf16.gmra.mxu0 %v636
    %v1102 = vpop.f32.mrf.mxu0
    %v1103 = vadd.f32 %v646, %v1102
    %v1104 = vpop.f32.mrf.mxu0
    %v1105 = vadd.f32 %v646, %v1104
    %1106 = vmatmul.bf16.gmra.mxu0 %v638
    %v1107 = vpop.f32.mrf.mxu0
    %v1108 = vadd.f32 %v646, %v1107
    %v1109 = vpop.f32.mrf.mxu0
    %v1110 = vadd.f32 %v646, %v1109
    %1111 = vmatmul.bf16.gmra.mxu0 %v640
    %v1112 = vpop.f32.mrf.mxu0
    %v1113 = vadd.f32 %v646, %v1112
    %v1114 = vpop.f32.mrf.mxu0
    %v1115 = vadd.f32 %v646, %v1114
    %1116 = vdwg.mxu0
    %1117 = vmatpush.bf16.msra.mxu0 %v906
    %1118 = vmatpush.bf16.msra.mxu0 %v902
    %1119 = vmatpush.bf16.msra.mxu0 %v898
    %1120 = vmatpush.bf16.msra.mxu0 %v894
    %1121 = vmatpush.bf16.msra.mxu0 %v890
    %1122 = vmatpush.bf16.msra.mxu0 %v886
    %1123 = vmatpush.bf16.msra.mxu0 %v882
    %1124 = vmatpush.bf16.msra.mxu0 %v878
    %1125 = vmatmul.bf16.gmra.mxu0 %v635
    %v1126 = vpop.f32.mrf.mxu0
    %v1127 = vadd.f32 %v1098, %v1126
    %v1128 = vpop.f32.mrf.mxu0
    %v1129 = vadd.f32 %v1100, %v1128
    %1130 = vmatmul.bf16.gmra.mxu0 %v637
    %v1131 = vpop.f32.mrf.mxu0
    %v1132 = vadd.f32 %v1103, %v1131
    %v1133 = vpop.f32.mrf.mxu0
    %v1134 = vadd.f32 %v1105, %v1133
    %1135 = vmatmul.bf16.gmra.mxu0 %v639
    %v1136 = vpop.f32.mrf.mxu0
    %v1137 = vadd.f32 %v1108, %v1136
    %v1138 = vpop.f32.mrf.mxu0
    %v1139 = vadd.f32 %v1110, %v1138
    %1140 = vmatmul.bf16.gmra.mxu0 %v641
    %v1141 = vpop.f32.mrf.mxu0
    %v1142 = vadd.f32 %v1113, %v1141
    %v1143 = vpop.f32.mrf.mxu0
    %v1144 = vadd.f32 %v1115, %v1143
    %1145 = vdwg.mxu0
    %1146 = vmatpush.bf16.msra.mxu0 %v875
    %1147 = vmatpush.bf16.msra.mxu0 %v871
    %1148 = vmatpush.bf16.msra.mxu0 %v867
    %1149 = vmatpush.bf16.msra.mxu0 %v863
    %1150 = vmatpush.bf16.msra.mxu0 %v859
    %1151 = vmatpush.bf16.msra.mxu0 %v855
    %1152 = vmatpush.bf16.msra.mxu0 %v851
    %1153 = vmatpush.bf16.msra.mxu0 %v847
    %1154 = vmatmul.bf16.gmra.mxu0 %v634
    %v1155 = vpop.f32.mrf.mxu0
    %v1156 = vadd.f32 %v647, %v1155
    %v1157 = vpop.f32.mrf.mxu0
    %v1158 = vadd.f32 %v647, %v1157
    %1159 = vmatmul.bf16.gmra.mxu0 %v636
    %v1160 = vpop.f32.mrf.mxu0
    %v1161 = vadd.f32 %v647, %v1160
    %v1162 = vpop.f32.mrf.mxu0
    %v1163 = vadd.f32 %v647, %v1162
    %1164 = vmatmul.bf16.gmra.mxu0 %v638
    %v1165 = vpop.f32.mrf.mxu0
    %v1166 = vadd.f32 %v647, %v1165
    %v1167 = vpop.f32.mrf.mxu0
    %v1168 = vadd.f32 %v647, %v1167
    %1169 = vmatmul.bf16.gmra.mxu0 %v640
    %v1170 = vpop.f32.mrf.mxu0
    %v1171 = vadd.f32 %v647, %v1170
    %v1172 = vpop.f32.mrf.mxu0
    %v1173 = vadd.f32 %v647, %v1172
    %1174 = vdwg.mxu0
    %1175 = vmatpush.bf16.msra.mxu0 %v907
    %1176 = vmatpush.bf16.msra.mxu0 %v903
    %1177 = vmatpush.bf16.msra.mxu0 %v899
    %1178 = vmatpush.bf16.msra.mxu0 %v895
    %1179 = vmatpush.bf16.msra.mxu0 %v891
    %1180 = vmatpush.bf16.msra.mxu0 %v887
    %1181 = vmatpush.bf16.msra.mxu0 %v883
    %1182 = vmatpush.bf16.msra.mxu0 %v879
    %1183 = vmatmul.bf16.gmra.mxu0 %v635
    %v1184 = vpop.f32.mrf.mxu0
    %v1185 = vadd.f32 %v1156, %v1184
    %v1186 = vpop.f32.mrf.mxu0
    %v1187 = vadd.f32 %v1158, %v1186
    %1188 = vmatmul.bf16.gmra.mxu0 %v637
    %v1189 = vpop.f32.mrf.mxu0
    %v1190 = vadd.f32 %v1161, %v1189
    %v1191 = vpop.f32.mrf.mxu0
    %v1192 = vadd.f32 %v1163, %v1191
    %1193 = vmatmul.bf16.gmra.mxu0 %v639
    %v1194 = vpop.f32.mrf.mxu0
    %v1195 = vadd.f32 %v1166, %v1194
    %v1196 = vpop.f32.mrf.mxu0
    %v1197 = vadd.f32 %v1168, %v1196
    %1198 = vmatmul.bf16.gmra.mxu0 %v641
    %v1199 = vpop.f32.mrf.mxu0
    %v1200 = vadd.f32 %v1171, %v1199
    %v1201 = vpop.f32.mrf.mxu0
    %v1202 = vadd.f32 %v1173, %v1201
    %1203 = vdwg.mxu0
    %v1204 = vld [vmem:[%s9] sm:$0xf]
    %v1205 = vld [vmem:[%s10] sm:$0xf]
    %v1206 = vadd.f32 %v1011, %v1013
    %v1207 = vadd.f32 %v1206, %v1016
    %v1208 = vadd.f32 %v1207, %v1018
    %v1209 = vadd.f32 %v1208, %v1021
    %v1210 = vadd.f32 %v1209, %v1023
    %v1211 = vadd.f32 %v1210, %v1026
    %v1212 = vadd.f32 %v1211, %v1028
    %v1213 = vrot.slane %v1212, 4
    %v1214 = vadd.f32 %v1212, %v1213
    %v1215 = vrot.slane %v1214, 2
    %v1216 = vadd.f32 %v1214, %v1215
    %v1217 = vrot.slane %v1216, 1
    %v1218 = vadd.f32 %v1216, %v1217
    %v1219 = vadd.f32 %v1069, %v1071
    %v1220 = vadd.f32 %v1219, %v1074
    %v1221 = vadd.f32 %v1220, %v1076
    %v1222 = vadd.f32 %v1221, %v1079
    %v1223 = vadd.f32 %v1222, %v1081
    %v1224 = vadd.f32 %v1223, %v1084
    %v1225 = vadd.f32 %v1224, %v1086
    %v1226 = vrot.slane %v1225, 4
    %v1227 = vadd.f32 %v1225, %v1226
    %v1228 = vrot.slane %v1227, 2
    %v1229 = vadd.f32 %v1227, %v1228
    %v1230 = vrot.slane %v1229, 1
    %v1231 = vadd.f32 %v1229, %v1230
    %v1232 = vadd.f32 %v1127, %v1129
    %v1233 = vadd.f32 %v1232, %v1132
    %v1234 = vadd.f32 %v1233, %v1134
    %v1235 = vadd.f32 %v1234, %v1137
    %v1236 = vadd.f32 %v1235, %v1139
    %v1237 = vadd.f32 %v1236, %v1142
    %v1238 = vadd.f32 %v1237, %v1144
    %v1239 = vrot.slane %v1238, 4
    %v1240 = vadd.f32 %v1238, %v1239
    %v1241 = vrot.slane %v1240, 2
    %v1242 = vadd.f32 %v1240, %v1241
    %v1243 = vrot.slane %v1242, 1
    %v1244 = vadd.f32 %v1242, %v1243
    %v1245 = vadd.f32 %v1185, %v1187
    %v1246 = vadd.f32 %v1245, %v1190
    %v1247 = vadd.f32 %v1246, %v1192
    %v1248 = vadd.f32 %v1247, %v1195
    %v1249 = vadd.f32 %v1248, %v1197
    %v1250 = vadd.f32 %v1249, %v1200
    %v1251 = vadd.f32 %v1250, %v1202
    %v1252 = vrot.slane %v1251, 4
    %v1253 = vadd.f32 %v1251, %v1252
    %v1254 = vrot.slane %v1253, 2
    %v1255 = vadd.f32 %v1253, %v1254
    %v1256 = vrot.slane %v1255, 1
    %v1257 = vadd.f32 %v1255, %v1256
    %v1258 = vmul.f32 %v1218, %v388
    %v1259 = vmul.f32 %v1231, %v388
    %v1260 = vmul.f32 %v1244, %v388
    %v1261 = vmul.f32 %v1257, %v388
    %v1262 = vsub.f32 %v1011, %v1258
    %v1263 = vsub.f32 %v1069, %v1259
    %v1264 = vsub.f32 %v1127, %v1260
    %v1265 = vsub.f32 %v1185, %v1261
    %v1266 = vsub.f32 %v1013, %v1258
    %v1267 = vsub.f32 %v1071, %v1259
    %v1268 = vsub.f32 %v1129, %v1260
    %v1269 = vsub.f32 %v1187, %v1261
    %v1270 = vsub.f32 %v1016, %v1258
    %v1271 = vsub.f32 %v1074, %v1259
    %v1272 = vsub.f32 %v1132, %v1260
    %v1273 = vsub.f32 %v1190, %v1261
    %v1274 = vsub.f32 %v1018, %v1258
    %v1275 = vsub.f32 %v1076, %v1259
    %v1276 = vsub.f32 %v1134, %v1260
    %v1277 = vsub.f32 %v1192, %v1261
    %v1278 = vsub.f32 %v1021, %v1258
    %v1279 = vsub.f32 %v1079, %v1259
    %v1280 = vsub.f32 %v1137, %v1260
    %v1281 = vsub.f32 %v1195, %v1261
    %v1282 = vsub.f32 %v1023, %v1258
    %v1283 = vsub.f32 %v1081, %v1259
    %v1284 = vsub.f32 %v1139, %v1260
    %v1285 = vsub.f32 %v1197, %v1261
    %v1286 = vsub.f32 %v1026, %v1258
    %v1287 = vsub.f32 %v1084, %v1259
    %v1288 = vsub.f32 %v1142, %v1260
    %v1289 = vsub.f32 %v1200, %v1261
    %v1290 = vsub.f32 %v1028, %v1258
    %v1291 = vsub.f32 %v1086, %v1259
    %v1292 = vsub.f32 %v1144, %v1260
    %v1293 = vsub.f32 %v1202, %v1261
    %v1294 = vmul.f32 %v1262, %v1262
    %v1295 = vmul.f32 %v1263, %v1263
    %v1296 = vmul.f32 %v1264, %v1264
    %v1297 = vmul.f32 %v1265, %v1265
    %v1298 = vmul.f32 %v1266, %v1266
    %v1299 = vmul.f32 %v1267, %v1267
    %v1300 = vmul.f32 %v1268, %v1268
    %v1301 = vmul.f32 %v1269, %v1269
    %v1302 = vmul.f32 %v1270, %v1270
    %v1303 = vmul.f32 %v1271, %v1271
    %v1304 = vmul.f32 %v1272, %v1272
    %v1305 = vmul.f32 %v1273, %v1273
    %v1306 = vmul.f32 %v1274, %v1274
    %v1307 = vmul.f32 %v1275, %v1275
    %v1308 = vmul.f32 %v1276, %v1276
    %v1309 = vmul.f32 %v1277, %v1277
    %v1310 = vmul.f32 %v1278, %v1278
    %v1311 = vmul.f32 %v1279, %v1279
    %v1312 = vmul.f32 %v1280, %v1280
    %v1313 = vmul.f32 %v1281, %v1281
    %v1314 = vmul.f32 %v1282, %v1282
    %v1315 = vmul.f32 %v1283, %v1283
    %v1316 = vmul.f32 %v1284, %v1284
    %v1317 = vmul.f32 %v1285, %v1285
    %v1318 = vmul.f32 %v1286, %v1286
    %v1319 = vmul.f32 %v1287, %v1287
    %v1320 = vmul.f32 %v1288, %v1288
    %v1321 = vmul.f32 %v1289, %v1289
    %v1322 = vmul.f32 %v1290, %v1290
    %v1323 = vmul.f32 %v1291, %v1291
    %v1324 = vmul.f32 %v1292, %v1292
    %v1325 = vmul.f32 %v1293, %v1293
    %v1326 = vadd.f32 %v1294, %v1298
    %v1327 = vadd.f32 %v1326, %v1302
    %v1328 = vadd.f32 %v1327, %v1306
    %v1329 = vadd.f32 %v1328, %v1310
    %v1330 = vadd.f32 %v1329, %v1314
    %v1331 = vadd.f32 %v1330, %v1318
    %v1332 = vadd.f32 %v1331, %v1322
    %v1333 = vrot.slane %v1332, 4
    %v1334 = vadd.f32 %v1332, %v1333
    %v1335 = vrot.slane %v1334, 2
    %v1336 = vadd.f32 %v1334, %v1335
    %v1337 = vrot.slane %v1336, 1
    %v1338 = vadd.f32 %v1336, %v1337
    %v1339 = vadd.f32 %v1295, %v1299
    %v1340 = vadd.f32 %v1339, %v1303
    %v1341 = vadd.f32 %v1340, %v1307
    %v1342 = vadd.f32 %v1341, %v1311
    %v1343 = vadd.f32 %v1342, %v1315
    %v1344 = vadd.f32 %v1343, %v1319
    %v1345 = vadd.f32 %v1344, %v1323
    %v1346 = vrot.slane %v1345, 4
    %v1347 = vadd.f32 %v1345, %v1346
    %v1348 = vrot.slane %v1347, 2
    %v1349 = vadd.f32 %v1347, %v1348
    %v1350 = vrot.slane %v1349, 1
    %v1351 = vadd.f32 %v1349, %v1350
    %v1352 = vadd.f32 %v1296, %v1300
    %v1353 = vadd.f32 %v1352, %v1304
    %v1354 = vadd.f32 %v1353, %v1308
    %v1355 = vadd.f32 %v1354, %v1312
    %v1356 = vadd.f32 %v1355, %v1316
    %v1357 = vadd.f32 %v1356, %v1320
    %v1358 = vadd.f32 %v1357, %v1324
    %v1359 = vrot.slane %v1358, 4
    %v1360 = vadd.f32 %v1358, %v1359
    %v1361 = vrot.slane %v1360, 2
    %v1362 = vadd.f32 %v1360, %v1361
    %v1363 = vrot.slane %v1362, 1
    %v1364 = vadd.f32 %v1362, %v1363
    %v1365 = vadd.f32 %v1297, %v1301
    %v1366 = vadd.f32 %v1365, %v1305
    %v1367 = vadd.f32 %v1366, %v1309
    %v1368 = vadd.f32 %v1367, %v1313
    %v1369 = vadd.f32 %v1368, %v1317
    %v1370 = vadd.f32 %v1369, %v1321
    %v1371 = vadd.f32 %v1370, %v1325
    %v1372 = vrot.slane %v1371, 4
    %v1373 = vadd.f32 %v1371, %v1372
    %v1374 = vrot.slane %v1373, 2
    %v1375 = vadd.f32 %v1373, %v1374
    %v1376 = vrot.slane %v1375, 1
    %v1377 = vadd.f32 %v1375, %v1376
    %v1378 = vmul.f32 %v1338, %v388
    %v1379 = vmul.f32 %v1351, %v388
    %v1380 = vmul.f32 %v1364, %v388
    %v1381 = vmul.f32 %v1377, %v388
    %v1382 = vadd.f32 %v1378, 0.8
    %v1383 = vadd.f32 %v1379, 0.8
    %v1384 = vadd.f32 %v1380, 0.8
    %v1385 = vadd.f32 %v1381, 0.8
    %v1386 = vrsqrt.pop %v1382
    %v1387 = vmul.f32 %v1386, %v1382
    %v1388 = vmul.f32 %v1387, %v1386
    %v1389 = vmul.f32 0.5, %v1388
    %v1390 = vsub.f32 1.5, %v1389
    %v1391 = vmul.f32 %v1386, %v1390
    %vm1392 = vweird.f32 %v1382
    %vm1393 = vweird.f32 %v1386
    %vm1394 = vmor %vm1392, %vm1393
    %v1395 = vsel %vm1394, %v1386, %v1391
    %v1396 = vrsqrt.pop %v1383
    %v1397 = vmul.f32 %v1396, %v1383
    %v1398 = vmul.f32 %v1397, %v1396
    %v1399 = vmul.f32 0.5, %v1398
    %v1400 = vsub.f32 1.5, %v1399
    %v1401 = vmul.f32 %v1396, %v1400
    %vm1402 = vweird.f32 %v1383
    %vm1403 = vweird.f32 %v1396
    %vm1404 = vmor %vm1402, %vm1403
    %v1405 = vsel %vm1404, %v1396, %v1401
    %v1406 = vrsqrt.pop %v1384
    %v1407 = vmul.f32 %v1406, %v1384
    %v1408 = vmul.f32 %v1407, %v1406
    %v1409 = vmul.f32 0.5, %v1408
    %v1410 = vsub.f32 1.5, %v1409
    %v1411 = vmul.f32 %v1406, %v1410
    %vm1412 = vweird.f32 %v1384
    %vm1413 = vweird.f32 %v1406
    %vm1414 = vmor %vm1412, %vm1413
    %v1415 = vsel %vm1414, %v1406, %v1411
    %v1416 = vrsqrt.pop %v1385
    %v1417 = vmul.f32 %v1416, %v1385
    %v1418 = vmul.f32 %v1417, %v1416
    %v1419 = vmul.f32 0.5, %v1418
    %v1420 = vsub.f32 1.5, %v1419
    %v1421 = vmul.f32 %v1416, %v1420
    %vm1422 = vweird.f32 %v1385
    %vm1423 = vweird.f32 %v1416
    %vm1424 = vmor %vm1422, %vm1423
    %v1425 = vsel %vm1424, %v1416, %v1421
    %v1430 = vrot.slane %v1405, 7
    %v1431 = vrot.slane %v1415, 6
    %v1432 = vrot.slane %v1425, 5
    %v1433 = vsel %vm476, %v1395, %v1430
    %vm1434 = vcmask 1042434
    %v1435 = vsel %vm1434, %v1431, %v1432
    %vm1436 = vcmask 1041408
    %v1437 = vsel %vm1436, %v1433, %v1435
    %v1439 = vmul.f32 %v1204, %v1437
    %v1441 = vperm.slane %v1439, 0
    %v1442 = vperm.slane %v1439, 1
    %v1443 = vperm.slane %v1439, 2
    %v1444 = vperm.slane %v1439, 3
    %v1449 = vmul.f32 %v1262, %v1441
    %v1450 = vmul.f32 %v1263, %v1442
    %v1451 = vmul.f32 %v1264, %v1443
    %v1452 = vmul.f32 %v1265, %v1444
    %v1453 = vmul.f32 %v1266, %v1441
    %v1454 = vmul.f32 %v1267, %v1442
    %v1455 = vmul.f32 %v1268, %v1443
    %v1456 = vmul.f32 %v1269, %v1444
    %v1457 = vmul.f32 %v1270, %v1441
    %v1458 = vmul.f32 %v1271, %v1442
    %v1459 = vmul.f32 %v1272, %v1443
    %v1460 = vmul.f32 %v1273, %v1444
    %v1461 = vmul.f32 %v1274, %v1441
    %v1462 = vmul.f32 %v1275, %v1442
    %v1463 = vmul.f32 %v1276, %v1443
    %v1464 = vmul.f32 %v1277, %v1444
    %v1465 = vmul.f32 %v1278, %v1441
    %v1466 = vmul.f32 %v1279, %v1442
    %v1467 = vmul.f32 %v1280, %v1443
    %v1468 = vmul.f32 %v1281, %v1444
    %v1469 = vmul.f32 %v1282, %v1441
    %v1470 = vmul.f32 %v1283, %v1442
    %v1471 = vmul.f32 %v1284, %v1443
    %v1472 = vmul.f32 %v1285, %v1444
    %v1473 = vmul.f32 %v1286, %v1441
    %v1474 = vmul.f32 %v1287, %v1442
    %v1475 = vmul.f32 %v1288, %v1443
    %v1476 = vmul.f32 %v1289, %v1444
    %v1477 = vmul.f32 %v1290, %v1441
    %v1478 = vmul.f32 %v1291, %v1442
    %v1479 = vmul.f32 %v1292, %v1443
    %v1480 = vmul.f32 %v1293, %v1444
    %v1482 = vperm.slane %v1205, 0
    %v1483 = vperm.slane %v1205, 1
    %v1484 = vperm.slane %v1205, 2
    %v1485 = vperm.slane %v1205, 3
    %v1490 = vadd.f32 %v1449, %v1482
    %v1491 = vadd.f32 %v1450, %v1483
    %v1492 = vadd.f32 %v1451, %v1484
    %v1493 = vadd.f32 %v1452, %v1485
    %v1494 = vadd.f32 %v1453, %v1482
    %v1495 = vadd.f32 %v1454, %v1483
    %v1496 = vadd.f32 %v1455, %v1484
    %v1497 = vadd.f32 %v1456, %v1485
    %v1498 = vadd.f32 %v1457, %v1482
    %v1499 = vadd.f32 %v1458, %v1483
    %v1500 = vadd.f32 %v1459, %v1484
    %v1501 = vadd.f32 %v1460, %v1485
    %v1502 = vadd.f32 %v1461, %v1482
    %v1503 = vadd.f32 %v1462, %v1483
    %v1504 = vadd.f32 %v1463, %v1484
    %v1505 = vadd.f32 %v1464, %v1485
    %v1506 = vadd.f32 %v1465, %v1482
    %v1507 = vadd.f32 %v1466, %v1483
    %v1508 = vadd.f32 %v1467, %v1484
    %v1509 = vadd.f32 %v1468, %v1485
    %v1510 = vadd.f32 %v1469, %v1482
    %v1511 = vadd.f32 %v1470, %v1483
    %v1512 = vadd.f32 %v1471, %v1484
    %v1513 = vadd.f32 %v1472, %v1485
    %v1514 = vadd.f32 %v1473, %v1482
    %v1515 = vadd.f32 %v1474, %v1483
    %v1516 = vadd.f32 %v1475, %v1484
    %v1517 = vadd.f32 %v1476, %v1485
    %v1518 = vadd.f32 %v1477, %v1482
    %v1519 = vadd.f32 %v1478, %v1483
    %v1520 = vadd.f32 %v1479, %v1484
    %v1521 = vadd.f32 %v1480, %v1485
    %vm1522 = vcmp.gt.f32.partialorder %v1490, 0.0
    %vm1523 = vcmp.gt.f32.partialorder %v1491, 0.0
    %vm1524 = vcmp.gt.f32.partialorder %v1492, 0.0
    %vm1525 = vcmp.gt.f32.partialorder %v1493, 0.0
    %vm1526 = vcmp.gt.f32.partialorder %v1494, 0.0
    %vm1527 = vcmp.gt.f32.partialorder %v1495, 0.0
    %vm1528 = vcmp.gt.f32.partialorder %v1496, 0.0
    %vm1529 = vcmp.gt.f32.partialorder %v1497, 0.0
    %vm1530 = vcmp.gt.f32.partialorder %v1498, 0.0
    %vm1531 = vcmp.gt.f32.partialorder %v1499, 0.0
    %vm1532 = vcmp.gt.f32.partialorder %v1500, 0.0
    %vm1533 = vcmp.gt.f32.partialorder %v1501, 0.0
    %vm1534 = vcmp.gt.f32.partialorder %v1502, 0.0
    %vm1535 = vcmp.gt.f32.partialorder %v1503, 0.0
    %vm1536 = vcmp.gt.f32.partialorder %v1504, 0.0
    %vm1537 = vcmp.gt.f32.partialorder %v1505, 0.0
    %vm1538 = vcmp.gt.f32.partialorder %v1506, 0.0
    %vm1539 = vcmp.gt.f32.partialorder %v1507, 0.0
    %vm1540 = vcmp.gt.f32.partialorder %v1508, 0.0
    %vm1541 = vcmp.gt.f32.partialorder %v1509, 0.0
    %vm1542 = vcmp.gt.f32.partialorder %v1510, 0.0
    %vm1543 = vcmp.gt.f32.partialorder %v1511, 0.0
    %vm1544 = vcmp.gt.f32.partialorder %v1512, 0.0
    %vm1545 = vcmp.gt.f32.partialorder %v1513, 0.0
    %vm1546 = vcmp.gt.f32.partialorder %v1514, 0.0
    %vm1547 = vcmp.gt.f32.partialorder %v1515, 0.0
    %vm1548 = vcmp.gt.f32.partialorder %v1516, 0.0
    %vm1549 = vcmp.gt.f32.partialorder %v1517, 0.0
    %vm1550 = vcmp.gt.f32.partialorder %v1518, 0.0
    %vm1551 = vcmp.gt.f32.partialorder %v1519, 0.0
    %vm1552 = vcmp.gt.f32.partialorder %v1520, 0.0
    %vm1553 = vcmp.gt.f32.partialorder %v1521, 0.0
    %v1554 = vmul.f32 %v1490, 0.2
    %v1555 = vmul.f32 %v1491, 0.2
    %v1556 = vmul.f32 %v1492, 0.2
    %v1557 = vmul.f32 %v1493, 0.2
    %v1558 = vmul.f32 %v1494, 0.2
    %v1559 = vmul.f32 %v1495, 0.2
    %v1560 = vmul.f32 %v1496, 0.2
    %v1561 = vmul.f32 %v1497, 0.2
    %v1562 = vmul.f32 %v1498, 0.2
    %v1563 = vmul.f32 %v1499, 0.2
    %v1564 = vmul.f32 %v1500, 0.2
    %v1565 = vmul.f32 %v1501, 0.2
    %v1566 = vmul.f32 %v1502, 0.2
    %v1567 = vmul.f32 %v1503, 0.2
    %v1568 = vmul.f32 %v1504, 0.2
    %v1569 = vmul.f32 %v1505, 0.2
    %v1570 = vmul.f32 %v1506, 0.2
    %v1571 = vmul.f32 %v1507, 0.2
    %v1572 = vmul.f32 %v1508, 0.2
    %v1573 = vmul.f32 %v1509, 0.2
    %v1574 = vmul.f32 %v1510, 0.2
    %v1575 = vmul.f32 %v1511, 0.2
    %v1576 = vmul.f32 %v1512, 0.2
    %v1577 = vmul.f32 %v1513, 0.2
    %v1578 = vmul.f32 %v1514, 0.2
    %v1579 = vmul.f32 %v1515, 0.2
    %v1580 = vmul.f32 %v1516, 0.2
    %v1581 = vmul.f32 %v1517, 0.2
    %v1582 = vmul.f32 %v1518, 0.2
    %v1583 = vmul.f32 %v1519, 0.2
    %v1584 = vmul.f32 %v1520, 0.2
    %v1585 = vmul.f32 %v1521, 0.2
    %v1586 = vsel %vm1522, %v1490, %v1554
    %v1587 = vsel %vm1523, %v1491, %v1555
    %v1588 = vsel %vm1524, %v1492, %v1556
    %v1589 = vsel %vm1525, %v1493, %v1557
    %v1590 = vsel %vm1526, %v1494, %v1558
    %v1591 = vsel %vm1527, %v1495, %v1559
    %v1592 = vsel %vm1528, %v1496, %v1560
    %v1593 = vsel %vm1529, %v1497, %v1561
    %v1594 = vsel %vm1530, %v1498, %v1562
    %v1595 = vsel %vm1531, %v1499, %v1563
    %v1596 = vsel %vm1532, %v1500, %v1564
    %v1597 = vsel %vm1533, %v1501, %v1565
    %v1598 = vsel %vm1534, %v1502, %v1566
    %v1599 = vsel %vm1535, %v1503, %v1567
    %v1600 = vsel %vm1536, %v1504, %v1568
    %v1601 = vsel %vm1537, %v1505, %v1569
    %v1602 = vsel %vm1538, %v1506, %v1570
    %v1603 = vsel %vm1539, %v1507, %v1571
    %v1604 = vsel %vm1540, %v1508, %v1572
    %v1605 = vsel %vm1541, %v1509, %v1573
    %v1606 = vsel %vm1542, %v1510, %v1574
    %v1607 = vsel %vm1543, %v1511, %v1575
    %v1608 = vsel %vm1544, %v1512, %v1576
    %v1609 = vsel %vm1545, %v1513, %v1577
    %v1610 = vsel %vm1546, %v1514, %v1578
    %v1611 = vsel %vm1547, %v1515, %v1579
    %v1612 = vsel %vm1548, %v1516, %v1580
    %v1613 = vsel %vm1549, %v1517, %v1581
    %v1614 = vsel %vm1550, %v1518, %v1582
    %v1615 = vsel %vm1551, %v1519, %v1583
    %v1616 = vsel %vm1552, %v1520, %v1584
    %v1617 = vsel %vm1553, %v1521, %v1585
    %v1618 = vld [vmem:[#allocation6] sm:$0xff]
    %v1619 = vld [vmem:[#allocation6 + $0x8] sm:$0xff]
    %v1620 = vld [vmem:[#allocation6 + $0x10] sm:$0xff]
    %v1621 = vld [vmem:[#allocation6 + $0x18] sm:$0xff]
    %v1622 = vld [vmem:[#allocation6 + $0x20] sm:$0xff]
    %v1623 = vld [vmem:[#allocation6 + $0x28] sm:$0xff]
    %v1624 = vld [vmem:[#allocation6 + $0x30] sm:$0xff]
    %v1625 = vld [vmem:[#allocation6 + $0x38] sm:$0xff]
    %v1626 = vld [vmem:[#allocation6 + $0x40] sm:$0xff]
    %v1627 = vld [vmem:[#allocation6 + $0x48] sm:$0xff]
    %v1628 = vld [vmem:[#allocation6 + $0x50] sm:$0xff]
    %v1629 = vld [vmem:[#allocation6 + $0x58] sm:$0xff]
    %v1630 = vld [vmem:[#allocation6 + $0x60] sm:$0xff]
    %v1631 = vld [vmem:[#allocation6 + $0x68] sm:$0xff]
    %v1632 = vld [vmem:[#allocation6 + $0x70] sm:$0xff]
    %v1633 = vld [vmem:[#allocation6 + $0x78] sm:$0xff]
    %v1634 = vld [vmem:[#allocation6 + $0x80] sm:$0xff]
    %v1635 = vld [vmem:[#allocation6 + $0x88] sm:$0xff]
    %v1636 = vld [vmem:[#allocation6 + $0x90] sm:$0xff]
    %v1637 = vld [vmem:[#allocation6 + $0x98] sm:$0xff]
    %v1638 = vld [vmem:[#allocation6 + $0xa0] sm:$0xff]
    %v1639 = vld [vmem:[#allocation6 + $0xa8] sm:$0xff]
    %v1640 = vld [vmem:[#allocation6 + $0xb0] sm:$0xff]
    %v1641 = vld [vmem:[#allocation6 + $0xb8] sm:$0xff]
    %v1642 = vld [vmem:[#allocation6 + $0xc0] sm:$0xff]
    %v1643 = vld [vmem:[#allocation6 + $0xc8] sm:$0xff]
    %v1644 = vld [vmem:[#allocation6 + $0xd0] sm:$0xff]
    %v1645 = vld [vmem:[#allocation6 + $0xd8] sm:$0xff]
    %v1646 = vld [vmem:[#allocation6 + $0xe0] sm:$0xff]
    %v1647 = vld [vmem:[#allocation6 + $0xe8] sm:$0xff]
    %v1648 = vld [vmem:[#allocation6 + $0xf0] sm:$0xff]
    %v1649 = vld [vmem:[#allocation6 + $0xf8] sm:$0xff]
    %v1650 = vld [vmem:[#allocation6 + $0x100] sm:$0xff]
    %v1651 = vld [vmem:[#allocation6 + $0x108] sm:$0xff]
    %v1652 = vld [vmem:[#allocation6 + $0x110] sm:$0xff]
    %v1653 = vld [vmem:[#allocation6 + $0x118] sm:$0xff]
    %v1654 = vld [vmem:[#allocation6 + $0x120] sm:$0xff]
    %v1655 = vld [vmem:[#allocation6 + $0x128] sm:$0xff]
    %v1656 = vld [vmem:[#allocation6 + $0x130] sm:$0xff]
    %v1657 = vld [vmem:[#allocation6 + $0x138] sm:$0xff]
    %v1658 = vld [vmem:[#allocation6 + $0x140] sm:$0xff]
    %v1659 = vld [vmem:[#allocation6 + $0x148] sm:$0xff]
    %v1660 = vld [vmem:[#allocation6 + $0x150] sm:$0xff]
    %v1661 = vld [vmem:[#allocation6 + $0x158] sm:$0xff]
    %v1662 = vld [vmem:[#allocation6 + $0x160] sm:$0xff]
    %v1663 = vld [vmem:[#allocation6 + $0x168] sm:$0xff]
    %v1664 = vld [vmem:[#allocation6 + $0x170] sm:$0xff]
    %v1665 = vld [vmem:[#allocation6 + $0x178] sm:$0xff]
    %v1666 = vld [vmem:[#allocation6 + $0x180] sm:$0xff]
    %v1667 = vld [vmem:[#allocation6 + $0x188] sm:$0xff]
    %v1668 = vld [vmem:[#allocation6 + $0x190] sm:$0xff]
    %v1669 = vld [vmem:[#allocation6 + $0x198] sm:$0xff]
    %v1670 = vld [vmem:[#allocation6 + $0x1a0] sm:$0xff]
    %v1671 = vld [vmem:[#allocation6 + $0x1a8] sm:$0xff]
    %v1672 = vld [vmem:[#allocation6 + $0x1b0] sm:$0xff]
    %v1673 = vld [vmem:[#allocation6 + $0x1b8] sm:$0xff]
    %v1674 = vld [vmem:[#allocation6 + $0x1c0] sm:$0xff]
    %v1675 = vld [vmem:[#allocation6 + $0x1c8] sm:$0xff]
    %v1676 = vld [vmem:[#allocation6 + $0x1d0] sm:$0xff]
    %v1677 = vld [vmem:[#allocation6 + $0x1d8] sm:$0xff]
    %v1678 = vld [vmem:[#allocation6 + $0x1e0] sm:$0xff]
    %v1679 = vld [vmem:[#allocation6 + $0x1e8] sm:$0xff]
    %v1680 = vld [vmem:[#allocation6 + $0x1f0] sm:$0xff]
    %v1681 = vld [vmem:[#allocation6 + $0x1f8] sm:$0xff]
    %v1682 = vpack.c.bf16 %v1590, %v1586
    %v1683 = vpack.c.bf16 %v1591, %v1587
    %v1684 = vpack.c.bf16 %v1592, %v1588
    %v1685 = vpack.c.bf16 %v1593, %v1589
    %v1686 = vpack.c.bf16 %v1598, %v1594
    %v1687 = vpack.c.bf16 %v1599, %v1595
    %v1688 = vpack.c.bf16 %v1600, %v1596
    %v1689 = vpack.c.bf16 %v1601, %v1597
    %v1690 = vpack.c.bf16 %v1606, %v1602
    %v1691 = vpack.c.bf16 %v1607, %v1603
    %v1692 = vpack.c.bf16 %v1608, %v1604
    %v1693 = vpack.c.bf16 %v1609, %v1605
    %v1694 = vpack.c.bf16 %v1614, %v1610
    %v1695 = vpack.c.bf16 %v1615, %v1611
    %v1696 = vpack.c.bf16 %v1616, %v1612
    %v1697 = vpack.c.bf16 %v1617, %v1613
    %v1698 = vld [vmem:[%s12] sm:$0x3]
    %v1700 = vperm.slane %v1698, 0
    %v1701 = vperm.slane %v1698, 1
    %v1768 = vunpack.c.l.b16 %v1618
    %v1769 = vunpack.c.h.b16 %v1618
    %v1770 = vunpack.c.l.b16 %v1619
    %v1771 = vunpack.c.h.b16 %v1619
    %v1772 = vunpack.c.l.b16 %v1620
    %v1773 = vunpack.c.h.b16 %v1620
    %v1774 = vunpack.c.l.b16 %v1621
    %v1775 = vunpack.c.h.b16 %v1621
    %v1776 = vunpack.c.l.b16 %v1622
    %v1777 = vunpack.c.h.b16 %v1622
    %v1778 = vunpack.c.l.b16 %v1623
    %v1779 = vunpack.c.h.b16 %v1623
    %v1780 = vunpack.c.l.b16 %v1624
    %v1781 = vunpack.c.h.b16 %v1624
    %v1782 = vunpack.c.l.b16 %v1625
    %v1783 = vunpack.c.h.b16 %v1625
    %v1784 = vunpack.c.l.b16 %v1626
    %v1785 = vunpack.c.h.b16 %v1626
    %v1786 = vunpack.c.l.b16 %v1627
    %v1787 = vunpack.c.h.b16 %v1627
    %v1788 = vunpack.c.l.b16 %v1628
    %v1789 = vunpack.c.h.b16 %v1628
    %v1790 = vunpack.c.l.b16 %v1629
    %v1791 = vunpack.c.h.b16 %v1629
    %v1792 = vunpack.c.l.b16 %v1630
    %v1793 = vunpack.c.h.b16 %v1630
    %v1794 = vunpack.c.l.b16 %v1631
    %v1795 = vunpack.c.h.b16 %v1631
    %v1796 = vunpack.c.l.b16 %v1632
    %v1797 = vunpack.c.h.b16 %v1632
    %v1798 = vunpack.c.l.b16 %v1633
    %v1799 = vunpack.c.h.b16 %v1633
    %v1800 = vunpack.c.l.b16 %v1634
    %v1801 = vunpack.c.h.b16 %v1634
    %v1802 = vunpack.c.l.b16 %v1635
    %v1803 = vunpack.c.h.b16 %v1635
    %v1804 = vunpack.c.l.b16 %v1636
    %v1805 = vunpack.c.h.b16 %v1636
    %v1806 = vunpack.c.l.b16 %v1637
    %v1807 = vunpack.c.h.b16 %v1637
    %v1808 = vunpack.c.l.b16 %v1638
    %v1809 = vunpack.c.h.b16 %v1638
    %v1810 = vunpack.c.l.b16 %v1639
    %v1811 = vunpack.c.h.b16 %v1639
    %v1812 = vunpack.c.l.b16 %v1640
    %v1813 = vunpack.c.h.b16 %v1640
    %v1814 = vunpack.c.l.b16 %v1641
    %v1815 = vunpack.c.h.b16 %v1641
    %v1816 = vunpack.c.l.b16 %v1642
    %v1817 = vunpack.c.h.b16 %v1642
    %v1818 = vunpack.c.l.b16 %v1643
    %v1819 = vunpack.c.h.b16 %v1643
    %v1820 = vunpack.c.l.b16 %v1644
    %v1821 = vunpack.c.h.b16 %v1644
    %v1822 = vunpack.c.l.b16 %v1645
    %v1823 = vunpack.c.h.b16 %v1645
    %v1824 = vunpack.c.l.b16 %v1646
    %v1825 = vunpack.c.h.b16 %v1646
    %v1826 = vunpack.c.l.b16 %v1647
    %v1827 = vunpack.c.h.b16 %v1647
    %v1828 = vunpack.c.l.b16 %v1648
    %v1829 = vunpack.c.h.b16 %v1648
    %v1830 = vunpack.c.l.b16 %v1649
    %v1831 = vunpack.c.h.b16 %v1649
    %v1832 = vunpack.c.l.b16 %v1650
    %v1833 = vunpack.c.h.b16 %v1650
    %v1834 = vunpack.c.l.b16 %v1651
    %v1835 = vunpack.c.h.b16 %v1651
    %v1836 = vunpack.c.l.b16 %v1652
    %v1837 = vunpack.c.h.b16 %v1652
    %v1838 = vunpack.c.l.b16 %v1653
    %v1839 = vunpack.c.h.b16 %v1653
    %v1840 = vunpack.c.l.b16 %v1654
    %v1841 = vunpack.c.h.b16 %v1654
    %v1842 = vunpack.c.l.b16 %v1655
    %v1843 = vunpack.c.h.b16 %v1655
    %v1844 = vunpack.c.l.b16 %v1656
    %v1845 = vunpack.c.h.b16 %v1656
    %v1846 = vunpack.c.l.b16 %v1657
    %v1847 = vunpack.c.h.b16 %v1657
    %v1848 = vunpack.c.l.b16 %v1658
    %v1849 = vunpack.c.h.b16 %v1658
    %v1850 = vunpack.c.l.b16 %v1659
    %v1851 = vunpack.c.h.b16 %v1659
    %v1852 = vunpack.c.l.b16 %v1660
    %v1853 = vunpack.c.h.b16 %v1660
    %v1854 = vunpack.c.l.b16 %v1661
    %v1855 = vunpack.c.h.b16 %v1661
    %v1856 = vunpack.c.l.b16 %v1662
    %v1857 = vunpack.c.h.b16 %v1662
    %v1858 = vunpack.c.l.b16 %v1663
    %v1859 = vunpack.c.h.b16 %v1663
    %v1860 = vunpack.c.l.b16 %v1664
    %v1861 = vunpack.c.h.b16 %v1664
    %v1862 = vunpack.c.l.b16 %v1665
    %v1863 = vunpack.c.h.b16 %v1665
    %v1864 = vunpack.c.l.b16 %v1666
    %v1865 = vunpack.c.h.b16 %v1666
    %v1866 = vunpack.c.l.b16 %v1667
    %v1867 = vunpack.c.h.b16 %v1667
    %v1868 = vunpack.c.l.b16 %v1668
    %v1869 = vunpack.c.h.b16 %v1668
    %v1870 = vunpack.c.l.b16 %v1669
    %v1871 = vunpack.c.h.b16 %v1669
    %v1872 = vunpack.c.l.b16 %v1670
    %v1873 = vunpack.c.h.b16 %v1670
    %v1874 = vunpack.c.l.b16 %v1671
    %v1875 = vunpack.c.h.b16 %v1671
    %v1876 = vunpack.c.l.b16 %v1672
    %v1877 = vunpack.c.h.b16 %v1672
    %v1878 = vunpack.c.l.b16 %v1673
    %v1879 = vunpack.c.h.b16 %v1673
    %v1880 = vunpack.c.l.b16 %v1674
    %v1881 = vunpack.c.h.b16 %v1674
    %v1882 = vunpack.c.l.b16 %v1675
    %v1883 = vunpack.c.h.b16 %v1675
    %v1884 = vunpack.c.l.b16 %v1676
    %v1885 = vunpack.c.h.b16 %v1676
    %v1886 = vunpack.c.l.b16 %v1677
    %v1887 = vunpack.c.h.b16 %v1677
    %v1888 = vunpack.c.l.b16 %v1678
    %v1889 = vunpack.c.h.b16 %v1678
    %v1890 = vunpack.c.l.b16 %v1679
    %v1891 = vunpack.c.h.b16 %v1679
    %v1892 = vunpack.c.l.b16 %v1680
    %v1893 = vunpack.c.h.b16 %v1680
    %v1894 = vunpack.c.l.b16 %v1681
    %v1895 = vunpack.c.h.b16 %v1681
    %v1896 = vpack.c.b16 %v1770, %v1768
    %v1897 = vpack.c.b16 %v1771, %v1769
    %v1898 = vpack.c.b16 %v1774, %v1772
    %v1899 = vpack.c.b16 %v1775, %v1773
    %v1900 = vpack.c.b16 %v1778, %v1776
    %v1901 = vpack.c.b16 %v1779, %v1777
    %v1902 = vpack.c.b16 %v1782, %v1780
    %v1903 = vpack.c.b16 %v1783, %v1781
    %v1904 = vpack.c.b16 %v1786, %v1784
    %v1905 = vpack.c.b16 %v1787, %v1785
    %v1906 = vpack.c.b16 %v1790, %v1788
    %v1907 = vpack.c.b16 %v1791, %v1789
    %v1908 = vpack.c.b16 %v1794, %v1792
    %v1909 = vpack.c.b16 %v1795, %v1793
    %v1910 = vpack.c.b16 %v1798, %v1796
    %v1911 = vpack.c.b16 %v1799, %v1797
    %v1912 = vpack.c.b16 %v1802, %v1800
    %v1913 = vpack.c.b16 %v1803, %v1801
    %v1914 = vpack.c.b16 %v1806, %v1804
    %v1915 = vpack.c.b16 %v1807, %v1805
    %v1916 = vpack.c.b16 %v1810, %v1808
    %v1917 = vpack.c.b16 %v1811, %v1809
    %v1918 = vpack.c.b16 %v1814, %v1812
    %v1919 = vpack.c.b16 %v1815, %v1813
    %v1920 = vpack.c.b16 %v1818, %v1816
    %v1921 = vpack.c.b16 %v1819, %v1817
    %v1922 = vpack.c.b16 %v1822, %v1820
    %v1923 = vpack.c.b16 %v1823, %v1821
    %v1924 = vpack.c.b16 %v1826, %v1824
    %v1925 = vpack.c.b16 %v1827, %v1825
    %v1926 = vpack.c.b16 %v1830, %v1828
    %v1927 = vpack.c.b16 %v1831, %v1829
    %v1928 = vpack.c.b16 %v1834, %v1832
    %v1929 = vpack.c.b16 %v1835, %v1833
    %v1930 = vpack.c.b16 %v1838, %v1836
    %v1931 = vpack.c.b16 %v1839, %v1837
    %v1932 = vpack.c.b16 %v1842, %v1840
    %v1933 = vpack.c.b16 %v1843, %v1841
    %v1934 = vpack.c.b16 %v1846, %v1844
    %v1935 = vpack.c.b16 %v1847, %v1845
    %v1936 = vpack.c.b16 %v1850, %v1848
    %v1937 = vpack.c.b16 %v1851, %v1849
    %v1938 = vpack.c.b16 %v1854, %v1852
    %v1939 = vpack.c.b16 %v1855, %v1853
    %v1940 = vpack.c.b16 %v1858, %v1856
    %v1941 = vpack.c.b16 %v1859, %v1857
    %v1942 = vpack.c.b16 %v1862, %v1860
    %v1943 = vpack.c.b16 %v1863, %v1861
    %v1944 = vpack.c.b16 %v1866, %v1864
    %v1945 = vpack.c.b16 %v1867, %v1865
    %v1946 = vpack.c.b16 %v1870, %v1868
    %v1947 = vpack.c.b16 %v1871, %v1869
    %v1948 = vpack.c.b16 %v1874, %v1872
    %v1949 = vpack.c.b16 %v1875, %v1873
    %v1950 = vpack.c.b16 %v1878, %v1876
    %v1951 = vpack.c.b16 %v1879, %v1877
    %v1952 = vpack.c.b16 %v1882, %v1880
    %v1953 = vpack.c.b16 %v1883, %v1881
    %v1954 = vpack.c.b16 %v1886, %v1884
    %v1955 = vpack.c.b16 %v1887, %v1885
    %v1956 = vpack.c.b16 %v1890, %v1888
    %v1957 = vpack.c.b16 %v1891, %v1889
    %v1958 = vpack.c.b16 %v1894, %v1892
    %v1959 = vpack.c.b16 %v1895, %v1893
    %2024 = vmatpush.bf16.msra.mxu0 %v1910
    %2025 = vmatpush.bf16.msra.mxu0 %v1908
    %2026 = vmatpush.bf16.msra.mxu0 %v1906
    %2027 = vmatpush.bf16.msra.mxu0 %v1904
    %2028 = vmatpush.bf16.msra.mxu0 %v1902
    %2029 = vmatpush.bf16.msra.mxu0 %v1900
    %2030 = vmatpush.bf16.msra.mxu0 %v1898
    %2031 = vmatpush.bf16.msra.mxu0 %v1896
    %2032 = vmatmul.bf16.gmra.mxu0 %v1682
    %v2033 = vpop.f32.mrf.mxu0
    %v2034 = vadd.f32 %v1700, %v2033
    %v2035 = vpop.f32.mrf.mxu0
    %v2036 = vadd.f32 %v1700, %v2035
    %2037 = vmatmul.bf16.gmra.mxu0 %v1686
    %v2038 = vpop.f32.mrf.mxu0
    %v2039 = vadd.f32 %v1700, %v2038
    %v2040 = vpop.f32.mrf.mxu0
    %v2041 = vadd.f32 %v1700, %v2040
    %2042 = vmatmul.bf16.gmra.mxu0 %v1690
    %v2043 = vpop.f32.mrf.mxu0
    %v2044 = vadd.f32 %v1700, %v2043
    %v2045 = vpop.f32.mrf.mxu0
    %v2046 = vadd.f32 %v1700, %v2045
    %2047 = vmatmul.bf16.gmra.mxu0 %v1694
    %v2048 = vpop.f32.mrf.mxu0
    %v2049 = vadd.f32 %v1700, %v2048
    %v2050 = vpop.f32.mrf.mxu0
    %v2051 = vadd.f32 %v1700, %v2050
    %2052 = vdwg.mxu0
    %2053 = vmatpush.bf16.msra.mxu0 %v1926
    %2054 = vmatpush.bf16.msra.mxu0 %v1924
    %2055 = vmatpush.bf16.msra.mxu0 %v1922
    %2056 = vmatpush.bf16.msra.mxu0 %v1920
    %2057 = vmatpush.bf16.msra.mxu0 %v1918
    %2058 = vmatpush.bf16.msra.mxu0 %v1916
    %2059 = vmatpush.bf16.msra.mxu0 %v1914
    %2060 = vmatpush.bf16.msra.mxu0 %v1912
    %2061 = vmatmul.bf16.gmra.mxu0 %v1683
    %v2062 = vpop.f32.mrf.mxu0
    %v2063 = vadd.f32 %v2034, %v2062
    %v2064 = vpop.f32.mrf.mxu0
    %v2065 = vadd.f32 %v2036, %v2064
    %2066 = vmatmul.bf16.gmra.mxu0 %v1687
    %v2067 = vpop.f32.mrf.mxu0
    %v2068 = vadd.f32 %v2039, %v2067
    %v2069 = vpop.f32.mrf.mxu0
    %v2070 = vadd.f32 %v2041, %v2069
    %2071 = vmatmul.bf16.gmra.mxu0 %v1691
    %v2072 = vpop.f32.mrf.mxu0
    %v2073 = vadd.f32 %v2044, %v2072
    %v2074 = vpop.f32.mrf.mxu0
    %v2075 = vadd.f32 %v2046, %v2074
    %2076 = vmatmul.bf16.gmra.mxu0 %v1695
    %v2077 = vpop.f32.mrf.mxu0
    %v2078 = vadd.f32 %v2049, %v2077
    %v2079 = vpop.f32.mrf.mxu0
    %v2080 = vadd.f32 %v2051, %v2079
    %2081 = vdwg.mxu0
    %2082 = vmatpush.bf16.msra.mxu0 %v1942
    %2083 = vmatpush.bf16.msra.mxu0 %v1940
    %2084 = vmatpush.bf16.msra.mxu0 %v1938
    %2085 = vmatpush.bf16.msra.mxu0 %v1936
    %2086 = vmatpush.bf16.msra.mxu0 %v1934
    %2087 = vmatpush.bf16.msra.mxu0 %v1932
    %2088 = vmatpush.bf16.msra.mxu0 %v1930
    %2089 = vmatpush.bf16.msra.mxu0 %v1928
    %2090 = vmatmul.bf16.gmra.mxu0 %v1684
    %v2091 = vpop.f32.mrf.mxu0
    %v2092 = vadd.f32 %v2063, %v2091
    %v2093 = vpop.f32.mrf.mxu0
    %v2094 = vadd.f32 %v2065, %v2093
    %2095 = vmatmul.bf16.gmra.mxu0 %v1688
    %v2096 = vpop.f32.mrf.mxu0
    %v2097 = vadd.f32 %v2068, %v2096
    %v2098 = vpop.f32.mrf.mxu0
    %v2099 = vadd.f32 %v2070, %v2098
    %2100 = vmatmul.bf16.gmra.mxu0 %v1692
    %v2101 = vpop.f32.mrf.mxu0
    %v2102 = vadd.f32 %v2073, %v2101
    %v2103 = vpop.f32.mrf.mxu0
    %v2104 = vadd.f32 %v2075, %v2103
    %2105 = vmatmul.bf16.gmra.mxu0 %v1696
    %v2106 = vpop.f32.mrf.mxu0
    %v2107 = vadd.f32 %v2078, %v2106
    %v2108 = vpop.f32.mrf.mxu0
    %v2109 = vadd.f32 %v2080, %v2108
    %2110 = vdwg.mxu0
    %2111 = vmatpush.bf16.msra.mxu0 %v1958
    %2112 = vmatpush.bf16.msra.mxu0 %v1956
    %2113 = vmatpush.bf16.msra.mxu0 %v1954
    %2114 = vmatpush.bf16.msra.mxu0 %v1952
    %2115 = vmatpush.bf16.msra.mxu0 %v1950
    %2116 = vmatpush.bf16.msra.mxu0 %v1948
    %2117 = vmatpush.bf16.msra.mxu0 %v1946
    %2118 = vmatpush.bf16.msra.mxu0 %v1944
    %2119 = vmatmul.bf16.gmra.mxu0 %v1685
    %v2120 = vpop.f32.mrf.mxu0
    %v2121 = vadd.f32 %v2092, %v2120
    %v2122 = vpop.f32.mrf.mxu0
    %v2123 = vadd.f32 %v2094, %v2122
    %2124 = vmatmul.bf16.gmra.mxu0 %v1689
    %v2125 = vpop.f32.mrf.mxu0
    %v2126 = vadd.f32 %v2097, %v2125
    %v2127 = vpop.f32.mrf.mxu0
    %v2128 = vadd.f32 %v2099, %v2127
    %2129 = vmatmul.bf16.gmra.mxu0 %v1693
    %v2130 = vpop.f32.mrf.mxu0
    %v2131 = vadd.f32 %v2102, %v2130
    %v2132 = vpop.f32.mrf.mxu0
    %v2133 = vadd.f32 %v2104, %v2132
    %2134 = vmatmul.bf16.gmra.mxu0 %v1697
    %v2135 = vpop.f32.mrf.mxu0
    %v2136 = vadd.f32 %v2107, %v2135
    %v2137 = vpop.f32.mrf.mxu0
    %v2138 = vadd.f32 %v2109, %v2137
    %2139 = vdwg.mxu0
    %2140 = vmatpush.bf16.msra.mxu0 %v1911
    %2141 = vmatpush.bf16.msra.mxu0 %v1909
    %2142 = vmatpush.bf16.msra.mxu0 %v1907
    %2143 = vmatpush.bf16.msra.mxu0 %v1905
    %2144 = vmatpush.bf16.msra.mxu0 %v1903
    %2145 = vmatpush.bf16.msra.mxu0 %v1901
    %2146 = vmatpush.bf16.msra.mxu0 %v1899
    %2147 = vmatpush.bf16.msra.mxu0 %v1897
    %2148 = vmatmul.bf16.gmra.mxu0 %v1682
    %v2149 = vpop.f32.mrf.mxu0
    %v2150 = vadd.f32 %v1701, %v2149
    %v2151 = vpop.f32.mrf.mxu0
    %v2152 = vadd.f32 %v1701, %v2151
    %2153 = vmatmul.bf16.gmra.mxu0 %v1686
    %v2154 = vpop.f32.mrf.mxu0
    %v2155 = vadd.f32 %v1701, %v2154
    %v2156 = vpop.f32.mrf.mxu0
    %v2157 = vadd.f32 %v1701, %v2156
    %2158 = vmatmul.bf16.gmra.mxu0 %v1690
    %v2159 = vpop.f32.mrf.mxu0
    %v2160 = vadd.f32 %v1701, %v2159
    %v2161 = vpop.f32.mrf.mxu0
    %v2162 = vadd.f32 %v1701, %v2161
    %2163 = vmatmul.bf16.gmra.mxu0 %v1694
    %v2164 = vpop.f32.mrf.mxu0
    %v2165 = vadd.f32 %v1701, %v2164
    %v2166 = vpop.f32.mrf.mxu0
    %v2167 = vadd.f32 %v1701, %v2166
    %2168 = vdwg.mxu0
    %2169 = vmatpush.bf16.msra.mxu0 %v1927
    %2170 = vmatpush.bf16.msra.mxu0 %v1925
    %2171 = vmatpush.bf16.msra.mxu0 %v1923
    %2172 = vmatpush.bf16.msra.mxu0 %v1921
    %2173 = vmatpush.bf16.msra.mxu0 %v1919
    %2174 = vmatpush.bf16.msra.mxu0 %v1917
    %2175 = vmatpush.bf16.msra.mxu0 %v1915
    %2176 = vmatpush.bf16.msra.mxu0 %v1913
    %2177 = vmatmul.bf16.gmra.mxu0 %v1683
    %v2178 = vpop.f32.mrf.mxu0
    %v2179 = vadd.f32 %v2150, %v2178
    %v2180 = vpop.f32.mrf.mxu0
    %v2181 = vadd.f32 %v2152, %v2180
    %2182 = vmatmul.bf16.gmra.mxu0 %v1687
    %v2183 = vpop.f32.mrf.mxu0
    %v2184 = vadd.f32 %v2155, %v2183
    %v2185 = vpop.f32.mrf.mxu0
    %v2186 = vadd.f32 %v2157, %v2185
    %2187 = vmatmul.bf16.gmra.mxu0 %v1691
    %v2188 = vpop.f32.mrf.mxu0
    %v2189 = vadd.f32 %v2160, %v2188
    %v2190 = vpop.f32.mrf.mxu0
    %v2191 = vadd.f32 %v2162, %v2190
    %2192 = vmatmul.bf16.gmra.mxu0 %v1695
    %v2193 = vpop.f32.mrf.mxu0
    %v2194 = vadd.f32 %v2165, %v2193
    %v2195 = vpop.f32.mrf.mxu0
    %v2196 = vadd.f32 %v2167, %v2195
    %2197 = vdwg.mxu0
    %2198 = vmatpush.bf16.msra.mxu0 %v1943
    %2199 = vmatpush.bf16.msra.mxu0 %v1941
    %2200 = vmatpush.bf16.msra.mxu0 %v1939
    %2201 = vmatpush.bf16.msra.mxu0 %v1937
    %2202 = vmatpush.bf16.msra.mxu0 %v1935
    %2203 = vmatpush.bf16.msra.mxu0 %v1933
    %2204 = vmatpush.bf16.msra.mxu0 %v1931
    %2205 = vmatpush.bf16.msra.mxu0 %v1929
    %2206 = vmatmul.bf16.gmra.mxu0 %v1684
    %v2207 = vpop.f32.mrf.mxu0
    %v2208 = vadd.f32 %v2179, %v2207
    %v2209 = vpop.f32.mrf.mxu0
    %v2210 = vadd.f32 %v2181, %v2209
    %2211 = vmatmul.bf16.gmra.mxu0 %v1688
    %v2212 = vpop.f32.mrf.mxu0
    %v2213 = vadd.f32 %v2184, %v2212
    %v2214 = vpop.f32.mrf.mxu0
    %v2215 = vadd.f32 %v2186, %v2214
    %2216 = vmatmul.bf16.gmra.mxu0 %v1692
    %v2217 = vpop.f32.mrf.mxu0
    %v2218 = vadd.f32 %v2189, %v2217
    %v2219 = vpop.f32.mrf.mxu0
    %v2220 = vadd.f32 %v2191, %v2219
    %2221 = vmatmul.bf16.gmra.mxu0 %v1696
    %v2222 = vpop.f32.mrf.mxu0
    %v2223 = vadd.f32 %v2194, %v2222
    %v2224 = vpop.f32.mrf.mxu0
    %v2225 = vadd.f32 %v2196, %v2224
    %2226 = vdwg.mxu0
    %2227 = vmatpush.bf16.msra.mxu0 %v1959
    %2228 = vmatpush.bf16.msra.mxu0 %v1957
    %2229 = vmatpush.bf16.msra.mxu0 %v1955
    %2230 = vmatpush.bf16.msra.mxu0 %v1953
    %2231 = vmatpush.bf16.msra.mxu0 %v1951
    %2232 = vmatpush.bf16.msra.mxu0 %v1949
    %2233 = vmatpush.bf16.msra.mxu0 %v1947
    %2234 = vmatpush.bf16.msra.mxu0 %v1945
    %2235 = vmatmul.bf16.gmra.mxu0 %v1685
    %v2236 = vpop.f32.mrf.mxu0
    %v2237 = vadd.f32 %v2208, %v2236
    %v2238 = vpop.f32.mrf.mxu0
    %v2239 = vadd.f32 %v2210, %v2238
    %2240 = vmatmul.bf16.gmra.mxu0 %v1689
    %v2241 = vpop.f32.mrf.mxu0
    %v2242 = vadd.f32 %v2213, %v2241
    %v2243 = vpop.f32.mrf.mxu0
    %v2244 = vadd.f32 %v2215, %v2243
    %2245 = vmatmul.bf16.gmra.mxu0 %v1693
    %v2246 = vpop.f32.mrf.mxu0
    %v2247 = vadd.f32 %v2218, %v2246
    %v2248 = vpop.f32.mrf.mxu0
    %v2249 = vadd.f32 %v2220, %v2248
    %2250 = vmatmul.bf16.gmra.mxu0 %v1697
    %v2251 = vpop.f32.mrf.mxu0
    %v2252 = vadd.f32 %v2223, %v2251
    %v2253 = vpop.f32.mrf.mxu0
    %v2254 = vadd.f32 %v2225, %v2253
    %2255 = vdwg.mxu0
    %v2256 = vtanh.pop %v2121
    %v2257 = vtanh.pop %v2237
    %v2258 = vtanh.pop %v2123
    %v2259 = vtanh.pop %v2239
    %v2260 = vtanh.pop %v2126
    %v2261 = vtanh.pop %v2242
    %v2262 = vtanh.pop %v2128
    %v2263 = vtanh.pop %v2244
    %v2264 = vtanh.pop %v2131
    %v2265 = vtanh.pop %v2247
    %v2266 = vtanh.pop %v2133
    %v2267 = vtanh.pop %v2249
    %v2268 = vtanh.pop %v2136
    %v2269 = vtanh.pop %v2252
    %v2270 = vtanh.pop %v2138
    %v2271 = vtanh.pop %v2254
    %2272 = vst [vmem:[%s13] sm:$0xff] %v2256
    %2273 = vst [vmem:[%s13 + $0x8] sm:$0xff] %v2257
    %2274 = vst [vmem:[%s13 + $0x10] sm:$0xff] %v2258
    %2275 = vst [vmem:[%s13 + $0x18] sm:$0xff] %v2259
    %2276 = vst [vmem:[%s13 + $0x20] sm:$0xff] %v2260
    %2277 = vst [vmem:[%s13 + $0x28] sm:$0xff] %v2261
    %2278 = vst [vmem:[%s13 + $0x30] sm:$0xff] %v2262
    %2279 = vst [vmem:[%s13 + $0x38] sm:$0xff] %v2263
    %2280 = vst [vmem:[%s13 + $0x40] sm:$0xff] %v2264
    %2281 = vst [vmem:[%s13 + $0x48] sm:$0xff] %v2265
    %2282 = vst [vmem:[%s13 + $0x50] sm:$0xff] %v2266
    %2283 = vst [vmem:[%s13 + $0x58] sm:$0xff] %v2267
    %2284 = vst [vmem:[%s13 + $0x60] sm:$0xff] %v2268
    %2285 = vst [vmem:[%s13 + $0x68] sm:$0xff] %v2269
    %2286 = vst [vmem:[%s13 + $0x70] sm:$0xff] %v2270
    %2287 = vst [vmem:[%s13 + $0x78] sm:$0xff] %v2271
    // Predicated region
    $region66: #{generator_forward.1} parent=1 // pred_check
      _
    $region67: #{generator_forward.1} parent=1 // pred_check_branch
      %2289 = sbr.rel (0) target = $region69
    $region68: #{generator_forward.1} parent=1 // pred_region
      _
    $region69: #{generator_forward.1} parent=1 // pred_fallthru
      _
    // Predicated region
    $region70: #{generator_forward.1} parent=1 // pred_check
      _
    $region71: #{generator_forward.1} parent=1 // pred_check_branch
      %2291 = sbr.rel (0) target = $region73
    $region72: #{generator_forward.1} parent=1 // pred_region
      _
    $region73: #{generator_forward.1} parent=1 // pred_fallthru
      _
    %2292 = vsyncpa [#allocation3], 1
    %2293 = vsyncpa [#allocation5], 1

</llo_original>
